<compile_context>
chip_gen: v7x
topology: tpu7x:2x2x1
jax: 0.10.0
libtpu: 0.0.40
codegen_flags: <defaults>
</compile_context>

<pallas_src>
from functools import partial

import numpy as np
import jax
import jax.numpy as jnp
from jax import lax
from jax.experimental import pallas as pl
from jax.experimental.pallas import tpu as pltpu

# ---------------- config (NHITS defaults, small sizes) ----------------
B = 2           # batch
ENC_IN = 4      # C  (enc_in)
INPUT_SIZE = 8  # L  (input_size)
H = 4           # forecast horizon h
HID = 32        # mlp hidden width  (mlp_units = 3 * [[HID, HID]])
N_POOL = [2, 2, 1]      # n_pool_kernel_size
N_FREQ = [4, 2, 1]      # n_freq_downsample
OUT_MULT = 2            # method='HierE2E' -> outputsize_multiplier = 2
EPS = 1e-5

SLOT = 128                       # lane-aligned slot width inside the packed weight/bias slabs
R_SLAB = max(HID, INPUT_SIZE)    # common row count of the weight slab (matrices zero-padded)
MXU_DTYPE = jnp.bfloat16         # matmul operand dtype (accumulation stays f32)
TILE_N_MAX = 512                 # row-tile size cap for the 1-D grid


def _round_up(x, m):
    return -(-x // m) * m


# ---------------- fused kernel ----------------
def nhits_fused_kernel(x_ref, rp_ref, w_ref, b_ref, out_ref, *, blocks_meta, L, H, out_mult):
    """x_ref:(TN,L) f32, rp_ref:(TN,4) f32 [w,b,1/w,0], w_ref:(R_SLAB,WC) bf16, b_ref:(1,BC) f32."""
    x = x_ref[...]                       # (TN, L)  un-flipped time on lanes, f32
    rp = rp_ref[...]                     # (TN, 4)
    w_rows = rp[:, 0:1]
    b_rows = rp[:, 1:2]
    invw_rows = rp[:, 2:3]

    tn = x.shape[0]
    f_lanes = out_mult * H

    # ---- RevIN 'norm' (stats per series, i.e. per row) ----
    mean = jnp.mean(x, axis=1, keepdims=True)
    var = jnp.mean((x - mean) ** 2, axis=1, keepdims=True)
    inv_std = lax.rsqrt(var + EPS)                   # one EUP op instead of sqrt + divide
    std = (var + EPS) * inv_std
    ins = (x - mean) * inv_std * w_rows + b_rows     # (TN, L)

    # forecast accumulator initialized with the last in-sample value (static lane slice)
    last = ins[:, L - 1:L]                           # (TN, 1)
    fore = jnp.broadcast_to(last, (tn, f_lanes))     # (TN, out_mult*H)

    resid = ins   # residuals kept in un-flipped time order (flip folded into weights)

    for m in blocks_meta:
        pool_k = m['pool_k']
        pp = m['pool_pad']

        # -- MaxPool1d(kernel=stride=pool_k): one select-matmul + 128-aligned lane-slice max
        if pool_k > 1:
            s_cat = w_ref[0:L, m['s_off']:m['s_off'] + pool_k * SLOT]          # (L, pool_k*128) bf16
            pooled_all = jnp.dot(resid.astype(MXU_DTYPE), s_cat,
                                 preferred_element_type=jnp.float32)           # (TN, pool_k*128)
            pooled = pooled_all[:, 0:pp]
            for j in range(1, pool_k):
                pooled = jnp.maximum(pooled, pooled_all[:, j * SLOT:j * SLOT + pp])
        else:
            pooled = resid                                                     # flip folded into w0

        # -- MLP: Linear -> [Linear, ReLU] x3
        w0 = w_ref[0:m['w0_rows'], m['w0_off']:m['w0_off'] + HID]
        b0 = b_ref[0:1, m['b0_off']:m['b0_off'] + HID]
        h = jnp.dot(pooled.astype(MXU_DTYPE), w0, preferred_element_type=jnp.float32) + b0
        for wh_off, bh_off in zip(m['hid_w_offs'], m['hid_b_offs']):
            wh = w_ref[0:HID, wh_off:wh_off + HID]
            bh = b_ref[0:1, bh_off:bh_off + HID]
            h = jnp.maximum(jnp.dot(h.astype(MXU_DTYPE), wh,
                                    preferred_element_type=jnp.float32) + bh, 0.0)

        # -- fused output projection: [backcast(un-flipped) | knots0@Wint | knots1@Wint]
        wo = w_ref[0:HID, m['wo_off']:m['wo_off'] + L + f_lanes]
        bo = b_ref[0:1, m['bo_off']:m['bo_off'] + L + f_lanes]
        theta = jnp.dot(h.astype(MXU_DTYPE), wo, preferred_element_type=jnp.float32) + bo
        resid = resid - theta[:, :L]                 # residual update (insample_mask == 1)
        fore = fore + theta[:, L:L + f_lanes]        # accumulate [f_mu | f_std]

    # ---- softplus (std head) + RevIN denorm / denorm_scale, one lane-dense store ----
    lane_f = lax.broadcasted_iota(jnp.int32, (tn, f_lanes), 1)
    is_mu = lane_f < H
    sp = jnp.where(fore > 20.0, fore,
                   jnp.log1p(jnp.exp(jnp.minimum(fore, 20.0))))   # softplus, torch threshold
    val = jnp.where(is_mu, fore - b_rows, sp)
    out_ref[...] = val * invw_rows * std + jnp.where(is_mu, mean, 0.0)


# ---------------- parameter / constant construction (with init-time folding + slab packing) ----------------
def linear_interp_matrix(K, h):
    """F.interpolate(mode='linear', align_corners=False) as a (K, h) matrix."""
    W = np.zeros((K, h), dtype=np.float32)
    if K == 1:
        W[0, :] = 1.0
        return W
    scale = K / h
    for j in range(h):
        src = max(scale * (j + 0.5) - 0.5, 0.0)
        i0 = min(int(np.floor(src)), K - 1)
        i1 = min(i0 + 1, K - 1)
        lam = src - i0
        W[i0, j] += 1.0 - lam
        W[i1, j] += lam
    return W


def init_params(key):
    C, L = ENC_IN, INPUT_SIZE
    n_rows = B * C

    rev_w = jnp.ones((C,), jnp.float32)
    rev_b = jnp.zeros((C,), jnp.float32)
    w_rows = jnp.broadcast_to(rev_w[None, :], (B, C)).reshape(n_rows, 1)
    b_rows = jnp.broadcast_to(rev_b[None, :], (B, C)).reshape(n_rows, 1)
    # packed per-row RevIN params: [weight, bias, 1/weight, pad]  (reciprocal hoisted to init)
    row_params = jnp.concatenate(
        [w_rows, b_rows, 1.0 / w_rows, jnp.zeros_like(w_rows)], axis=1)   # (N, 4)

    params = {'rev_w': rev_w, 'rev_b': rev_b, 'row_params': row_params,
              'blocks_raw': []}

    # --- slab builders: every matrix/vector gets its own 128-lane-aligned slot ---
    w_slots, b_slots = [], []

    def put_w(mat):
        mat = np.asarray(mat, np.float32)
        assert mat.shape[0] <= R_SLAB and mat.shape[1] <= SLOT
        slot = np.zeros((R_SLAB, SLOT), np.float32)
        slot[:mat.shape[0], :mat.shape[1]] = mat
        off = len(w_slots) * SLOT
        w_slots.append(slot)
        return off

    def put_b(vec):
        vec = np.asarray(vec, np.float32).reshape(1, -1)
        assert vec.shape[1] <= SLOT
        slot = np.zeros((1, SLOT), np.float32)
        slot[:, :vec.shape[1]] = vec
        off = len(b_slots) * SLOT
        b_slots.append(slot)
        return off

    keys = jax.random.split(key, len(N_POOL))

    def lin(k, fin, fout):
        kw, kb = jax.random.split(k)
        bound = float(1.0 / np.sqrt(fin))
        w = jax.random.uniform(kw, (fin, fout), jnp.float32, -bound, bound)
        b = jax.random.uniform(kb, (1, fout), jnp.float32, -bound, bound)
        return w, b

    blocks_meta = []
    for i, (pool_k, freq) in enumerate(zip(N_POOL, N_FREQ)):
        # TODO(synk): pad remainder pooling windows with -inf when L % pool_k != 0 (ceil_mode).
        assert L % pool_k == 0, "select-matmul pooling assumes full windows"
        Lp = int(np.ceil(L / pool_k))
        pool_pad = _round_up(Lp, 8)
        K = max(H // freq, 1)
        n_theta = L + OUT_MULT * K
        bkeys = jax.random.split(keys[i], 5)
        w0, b0 = lin(bkeys[0], Lp, HID)
        w1, b1 = lin(bkeys[1], HID, HID)
        w2, b2 = lin(bkeys[2], HID, HID)
        w3, b3 = lin(bkeys[3], HID, HID)
        wo, bo = lin(bkeys[4], HID, n_theta)
        Wint = linear_interp_matrix(K, H)                         # (K, H)

        # fold time-flip into backcast columns and Wint into the knot columns of wo/bo
        wo_np, bo_np = np.asarray(wo), np.asarray(bo)
        wo_fused = np.concatenate(
            [np.ascontiguousarray(wo_np[:, :L][:, ::-1]),
             wo_np[:, L:L + K] @ Wint,
             wo_np[:, L + K:L + 2 * K] @ Wint], axis=1).astype(np.float32)
        bo_fused = np.concatenate(
            [np.ascontiguousarray(bo_np[:, :L][:, ::-1]),
             bo_np[:, L:L + K] @ Wint,
             bo_np[:, L + K:L + 2 * K] @ Wint], axis=1).astype(np.float32)

        if pool_k > 1:
            # replica j, column p selects un-flipped index L-1-(p*pool_k+j) (flip folded in);
            # pooled[p] = max_j (resid @ S_cat)[:, j*128 + p]
            s_off = None
            for j in range(pool_k):
                S_j = np.zeros((L, Lp), np.float32)
                for p in range(Lp):
                    src = p * pool_k + j                          # index in flipped series
                    if src < L:
                        S_j[L - 1 - src, p] = 1.0
                off_j = put_w(S_j)
                if j == 0:
                    s_off = off_j
            w0_np = np.asarray(w0)                                # (Lp, HID), flip via S_cat
            w0_rows = pool_pad
        else:
            s_off = -1
            w0_np = np.ascontiguousarray(np.asarray(w0)[::-1, :])  # fold flip into w0
            w0_rows = L

        meta = dict(
            pool_k=pool_k, pool_pad=pool_pad, s_off=s_off,
            w0_off=put_w(w0_np), w0_rows=w0_rows,
            hid_w_offs=(put_w(np.asarray(w1)), put_w(np.asarray(w2)), put_w(np.asarray(w3))),
            wo_off=put_w(wo_fused),
            b0_off=put_b(np.asarray(b0)),
            hid_b_offs=(put_b(np.asarray(b1)), put_b(np.asarray(b2)), put_b(np.asarray(b3))),
            bo_off=put_b(bo_fused),
        )
        blocks_meta.append(meta)

        # raw (un-folded) params kept only for the pure-JAX reference check
        params['blocks_raw'].append(dict(
            pool_k=pool_k, Lp=Lp, K=K,
            w0_raw=w0, b0=b0, w1=w1, b1=b1, w2=w2, b2=b2, w3=w3, b3=b3,
            wo_raw=wo, bo_raw=bo, Wint=jnp.asarray(Wint)))

    params['blocks_meta'] = tuple(blocks_meta)
    # single bf16 weight slab + single f32 bias slab (2 parameter DMAs total)
    params['w_slab'] = jnp.asarray(np.concatenate(w_slots, axis=1), dtype=MXU_DTYPE)
    params['b_slab'] = jnp.asarray(np.concatenate(b_slots, axis=1), dtype=jnp.float32)
    return params


# ---------------- forward pass (single pallas_call, 1-D parallel row grid) ----------------
def nhits_forward(batch_x, params):
    B_, L_, C_ = batch_x.shape
    assert L_ == INPUT_SIZE and C_ == ENC_IN
    N = B_ * C_
    # TODO(synk): for large B, produce the (B, C, L) layout upstream (or fold the relayout into
    #             the kernel's input tiling) to avoid this extra HBM round-trip.
    x_rows = jnp.transpose(batch_x, (0, 2, 1)).reshape(N, L_)     # (N, L), un-flipped
    rp = params['row_params']

    # row-tile the grid: sublane-aligned tiles, parallel semantics (megacore on v7x, pipelining everywhere)
    n_pad = _round_up(N, 8)
    tile_n = n_pad if n_pad <= TILE_N_MAX else TILE_N_MAX
    if n_pad % tile_n:
        n_pad = _round_up(n_pad, tile_n)
    if n_pad != N:
        x_rows = jnp.pad(x_rows, ((0, n_pad - N), (0, 0)))
        rp = jnp.pad(rp, ((0, n_pad - N), (0, 0)))
    num_tiles = n_pad // tile_n

    kern = partial(nhits_fused_kernel, blocks_meta=params['blocks_meta'],
                   L=L_, H=H, out_mult=OUT_MULT)
    out = pl.pallas_call(
        kern,
        out_shape=jax.ShapeDtypeStruct((n_pad, OUT_MULT * H), jnp.float32),
        grid=(num_tiles,),
        in_specs=[
            pl.BlockSpec((tile_n, L_), lambda i: (i, 0)),                 # x rows, tiled
            pl.BlockSpec((tile_n, 4), lambda i: (i, 0)),                  # per-row RevIN params
            pl.BlockSpec(params['w_slab'].shape, lambda i: (0, 0)),       # weight slab, resident
            pl.BlockSpec(params['b_slab'].shape, lambda i: (0, 0)),       # bias slab, resident
        ],
        out_specs=pl.BlockSpec((tile_n, OUT_MULT * H), lambda i: (i, 0)),
        compiler_params=pltpu.CompilerParams(dimension_semantics=("parallel",)),
    )(x_rows, rp, params['w_slab'], params['b_slab'])

    out = out[:N]
    # TODO(synk): output last dim is OUT_MULT*H = 8 (<128 lanes); revisit lane-dense packing if H grows.
    mu_out = out[:, :H].reshape(B_, C_, H).transpose(0, 2, 1)             # (B, H, C)
    std_out = out[:, H:OUT_MULT * H].reshape(B_, C_, H).transpose(0, 2, 1)
    return mu_out, std_out


# ---------------- pure-JAX reference (un-fused, un-folded, f32) for validation ----------------
def nhits_reference(batch_x, params):
    B_, L_, C_ = batch_x.shape
    N = B_ * C_
    rev_w = params['rev_w'].reshape(1, 1, C_)
    rev_b = params['rev_b'].reshape(1, 1, C_)
    mean = jnp.mean(batch_x, axis=1, keepdims=True)
    std = jnp.sqrt(jnp.mean((batch_x - mean) ** 2, axis=1, keepdims=True) + EPS)
    xn = (batch_x - mean) / std * rev_w + rev_b
    ins = jnp.transpose(xn, (0, 2, 1)).reshape(N, L_)
    resid = ins[:, ::-1]
    fore = jnp.broadcast_to(ins[:, -1][:, None, None], (N, H, OUT_MULT))
    for bp in params['blocks_raw']:
        pk, Lp, K = bp['pool_k'], bp['Lp'], bp['K']
        pooled = resid.reshape(N, Lp, pk).max(axis=-1)
        h = pooled @ bp['w0_raw'] + bp['b0']
        for wn, bn in (('w1', 'b1'), ('w2', 'b2'), ('w3', 'b3')):
            h = jnp.maximum(h @ bp[wn] + bp[bn], 0.0)
        theta = h @ bp['wo_raw'] + bp['bo_raw']
        backcast = theta[:, :L_]
        knots = theta[:, L_:].reshape(N, OUT_MULT, K)
        fcast = jnp.einsum('nok,kh->nho', knots, bp['Wint'])
        resid = resid - backcast
        fore = fore + fcast
    fore = fore.reshape(B_, C_, H, OUT_MULT).transpose(0, 2, 1, 3)
    mu = fore[..., 0]
    sdr = fore[..., 1]
    sp = jnp.where(sdr > 20.0, sdr, jnp.log1p(jnp.exp(jnp.minimum(sdr, 20.0))))
    mu_out = (mu - rev_b) / rev_w * std + mean
    sd_out = sp / rev_w * std
    return mu_out, sd_out


# ---------------- main ----------------
if __name__ == "__main__":
    key = jax.random.PRNGKey(0)
    k_x, k_p = jax.random.split(key)
    batch_x = jax.random.normal(k_x, (B, INPUT_SIZE, ENC_IN), jnp.float32)
    params = init_params(k_p)

    mu_out, std_out = nhits_forward(batch_x, params)
    jax.block_until_ready((mu_out, std_out))

    assert mu_out.shape == (B, H, ENC_IN)
    assert std_out.shape == (B, H, ENC_IN)
    assert bool(jnp.all(jnp.isfinite(mu_out))) and bool(jnp.all(jnp.isfinite(std_out)))
    assert bool(jnp.all(std_out >= 0.0))

    # validate the fused/folded/packed kernel against the straightforward f32 reference
    # (tolerance loosened slightly because the kernel uses bf16 MXU operands with f32 accumulation)
    mu_ref, sd_ref = nhits_reference(batch_x, params)
    assert bool(jnp.allclose(mu_out, mu_ref, atol=1e-1, rtol=1e-1))
    assert bool(jnp.allclose(std_out, sd_ref, atol=1e-1, rtol=1e-1))

    print("KERNEL_OK")
</pallas_src>

<mosaic_0001>
module attributes {stable_mosaic.version = 11 : i64} {
  func.func @nhits_fused_kernel(%arg0: i32, %arg1: memref<8x8xf32, #tpu.memory_space<vmem>>, %arg2: memref<8x4xf32, #tpu.memory_space<vmem>>, %arg3: memref<32x2432xbf16, #tpu.memory_space<vmem>>, %arg4: memref<1x1920xf32, #tpu.memory_space<vmem>>, %arg5: memref<8x8xf32, #tpu.memory_space<vmem>>) attributes {dimension_semantics = [#tpu.dimension_semantics<parallel>], iteration_bounds = array<i64: 1>, scalar_prefetch = 0 : i64, scratch_operands = 0 : i64, tpu.core_type = #tpu.core_type<tc>, window_params = [{transform_indices = @transform_0, window_bounds = array<i64: 8, 8>}, {transform_indices = @transform_1, window_bounds = array<i64: 8, 4>}, {pipeline_mode = #tpu.pipeline_mode<synchronous>, transform_indices = @transform_2, window_bounds = array<i64: 32, 2432>}, {pipeline_mode = #tpu.pipeline_mode<synchronous>, transform_indices = @transform_3, window_bounds = array<i64: 1, 1920>}, {transform_indices = @transform_4, window_bounds = array<i64: 8, 8>}]} {
    %c0 = arith.constant 0 : index
    %c0_0 = arith.constant 0 : index
    %0 = vector.load %arg1[%c0, %c0_0] : memref<8x8xf32, #tpu.memory_space<vmem>>, vector<8x8xf32>
    %c0_1 = arith.constant 0 : index
    %c0_2 = arith.constant 0 : index
    %1 = vector.load %arg2[%c0_1, %c0_2] : memref<8x4xf32, #tpu.memory_space<vmem>>, vector<8x4xf32>
    %2 = vector.extract_strided_slice %1 {offsets = [0, 0], sizes = [8, 1], strides = [1, 1]} : vector<8x4xf32> to vector<8x1xf32>
    %3 = vector.extract_strided_slice %1 {offsets = [0, 1], sizes = [8, 1], strides = [1, 1]} : vector<8x4xf32> to vector<8x1xf32>
    %4 = vector.extract_strided_slice %1 {offsets = [0, 2], sizes = [8, 1], strides = [1, 1]} : vector<8x4xf32> to vector<8x1xf32>
    %cst = arith.constant dense<0.000000e+00> : vector<8xf32>
    %5 = vector.multi_reduction <add>, %0, %cst [1] : vector<8x8xf32> to vector<8xf32>
    %6 = vector.shape_cast %5 : vector<8xf32> to vector<8x1xf32>
    %cst_3 = arith.constant 8.000000e+00 : f32
    %7 = vector.broadcast %cst_3 : f32 to vector<8x1xf32>
    %8 = arith.divf %6, %7 : vector<8x1xf32>
    %9 = vector.broadcast %8 : vector<8x1xf32> to vector<8x8xf32>
    %10 = arith.subf %0, %9 : vector<8x8xf32>
    %11 = arith.mulf %10, %10 : vector<8x8xf32>
    %cst_4 = arith.constant dense<0.000000e+00> : vector<8xf32>
    %12 = vector.multi_reduction <add>, %11, %cst_4 [1] : vector<8x8xf32> to vector<8xf32>
    %13 = vector.shape_cast %12 : vector<8xf32> to vector<8x1xf32>
    %cst_5 = arith.constant 8.000000e+00 : f32
    %14 = vector.broadcast %cst_5 : f32 to vector<8x1xf32>
    %15 = arith.divf %13, %14 : vector<8x1xf32>
    %cst_6 = arith.constant 9.99999974E-6 : f32
    %16 = vector.broadcast %cst_6 : f32 to vector<8x1xf32>
    %17 = arith.addf %15, %16 : vector<8x1xf32>
    %18 = math.rsqrt %17 : vector<8x1xf32>
    %cst_7 = arith.constant 9.99999974E-6 : f32
    %19 = vector.broadcast %cst_7 : f32 to vector<8x1xf32>
    %20 = arith.addf %15, %19 : vector<8x1xf32>
    %21 = arith.mulf %20, %18 : vector<8x1xf32>
    %22 = vector.broadcast %8 : vector<8x1xf32> to vector<8x8xf32>
    %23 = arith.subf %0, %22 : vector<8x8xf32>
    %24 = vector.broadcast %18 : vector<8x1xf32> to vector<8x8xf32>
    %25 = arith.mulf %23, %24 : vector<8x8xf32>
    %26 = vector.broadcast %2 : vector<8x1xf32> to vector<8x8xf32>
    %27 = arith.mulf %25, %26 : vector<8x8xf32>
    %28 = vector.broadcast %3 : vector<8x1xf32> to vector<8x8xf32>
    %29 = arith.addf %27, %28 : vector<8x8xf32>
    %30 = vector.extract_strided_slice %29 {offsets = [0, 7], sizes = [8, 1], strides = [1, 1]} : vector<8x8xf32> to vector<8x1xf32>
    %31 = vector.shape_cast %30 : vector<8x1xf32> to vector<8x1xf32>
    %32 = vector.broadcast %31 : vector<8x1xf32> to vector<8x8xf32>
    %c0_8 = arith.constant 0 : index
    %c0_9 = arith.constant 0 : index
    %33 = vector.load %arg3[%c0_8, %c0_9] : memref<32x2432xbf16, #tpu.memory_space<vmem>>, vector<8x256xbf16>
    %34 = arith.truncf %29 : vector<8x8xf32> to vector<8x8xbf16>
    %cst_10 = arith.constant dense<0.000000e+00> : vector<8x256xf32>
    %35 = tpu.matmul %34, %33, %cst_10 {dimension_numbers = #tpu.dot_dimension_numbers<[1], [0], [0], [1], [0, 0, 1, 1], [], []>} : vector<8x8xbf16>, vector<8x256xbf16>, vector<8x256xf32> -> vector<8x256xf32>
    %36 = vector.extract_strided_slice %35 {offsets = [0, 0], sizes = [8, 8], strides = [1, 1]} : vector<8x256xf32> to vector<8x8xf32>
    %37 = vector.extract_strided_slice %35 {offsets = [0, 128], sizes = [8, 8], strides = [1, 1]} : vector<8x256xf32> to vector<8x8xf32>
    %38 = arith.maximumf %36, %37 : vector<8x8xf32>
    %c0_11 = arith.constant 0 : index
    %c256 = arith.constant 256 : index
    %39 = vector.load %arg3[%c0_11, %c256] : memref<32x2432xbf16, #tpu.memory_space<vmem>>, vector<8x32xbf16>
    %c0_12 = arith.constant 0 : index
    %c0_13 = arith.constant 0 : index
    %40 = vector.load %arg4[%c0_12, %c0_13] : memref<1x1920xf32, #tpu.memory_space<vmem>>, vector<1x32xf32>
    %41 = arith.truncf %38 : vector<8x8xf32> to vector<8x8xbf16>
    %cst_14 = arith.constant dense<0.000000e+00> : vector<8x32xf32>
    %42 = tpu.matmul %41, %39, %cst_14 {dimension_numbers = #tpu.dot_dimension_numbers<[1], [0], [0], [1], [0, 0, 1, 1], [], []>} : vector<8x8xbf16>, vector<8x32xbf16>, vector<8x32xf32> -> vector<8x32xf32>
    %43 = vector.broadcast %40 : vector<1x32xf32> to vector<8x32xf32>
    %44 = arith.addf %42, %43 : vector<8x32xf32>
    %c0_15 = arith.constant 0 : index
    %c384 = arith.constant 384 : index
    %45 = vector.load %arg3[%c0_15, %c384] : memref<32x2432xbf16, #tpu.memory_space<vmem>>, vector<32x32xbf16>
    %c0_16 = arith.constant 0 : index
    %c128 = arith.constant 128 : index
    %46 = vector.load %arg4[%c0_16, %c128] : memref<1x1920xf32, #tpu.memory_space<vmem>>, vector<1x32xf32>
    %47 = arith.truncf %44 : vector<8x32xf32> to vector<8x32xbf16>
    %cst_17 = arith.constant dense<0.000000e+00> : vector<8x32xf32>
    %48 = tpu.matmul %47, %45, %cst_17 {dimension_numbers = #tpu.dot_dimension_numbers<[1], [0], [0], [1], [0, 0, 1, 1], [], []>} : vector<8x32xbf16>, vector<32x32xbf16>, vector<8x32xf32> -> vector<8x32xf32>
    %49 = vector.broadcast %46 : vector<1x32xf32> to vector<8x32xf32>
    %50 = arith.addf %48, %49 : vector<8x32xf32>
    %cst_18 = arith.constant 0.000000e+00 : f32
    %51 = vector.broadcast %cst_18 : f32 to vector<8x32xf32>
    %52 = arith.maximumf %50, %51 : vector<8x32xf32>
    %c0_19 = arith.constant 0 : index
    %c512 = arith.constant 512 : index
    %53 = vector.load %arg3[%c0_19, %c512] : memref<32x2432xbf16, #tpu.memory_space<vmem>>, vector<32x32xbf16>
    %c0_20 = arith.constant 0 : index
    %c256_21 = arith.constant 256 : index
    %54 = vector.load %arg4[%c0_20, %c256_21] : memref<1x1920xf32, #tpu.memory_space<vmem>>, vector<1x32xf32>
    %55 = arith.truncf %52 : vector<8x32xf32> to vector<8x32xbf16>
    %cst_22 = arith.constant dense<0.000000e+00> : vector<8x32xf32>
    %56 = tpu.matmul %55, %53, %cst_22 {dimension_numbers = #tpu.dot_dimension_numbers<[1], [0], [0], [1], [0, 0, 1, 1], [], []>} : vector<8x32xbf16>, vector<32x32xbf16>, vector<8x32xf32> -> vector<8x32xf32>
    %57 = vector.broadcast %54 : vector<1x32xf32> to vector<8x32xf32>
    %58 = arith.addf %56, %57 : vector<8x32xf32>
    %cst_23 = arith.constant 0.000000e+00 : f32
    %59 = vector.broadcast %cst_23 : f32 to vector<8x32xf32>
    %60 = arith.maximumf %58, %59 : vector<8x32xf32>
    %c0_24 = arith.constant 0 : index
    %c640 = arith.constant 640 : index
    %61 = vector.load %arg3[%c0_24, %c640] : memref<32x2432xbf16, #tpu.memory_space<vmem>>, vector<32x32xbf16>
    %c0_25 = arith.constant 0 : index
    %c384_26 = arith.constant 384 : index
    %62 = vector.load %arg4[%c0_25, %c384_26] : memref<1x1920xf32, #tpu.memory_space<vmem>>, vector<1x32xf32>
    %63 = arith.truncf %60 : vector<8x32xf32> to vector<8x32xbf16>
    %cst_27 = arith.constant dense<0.000000e+00> : vector<8x32xf32>
    %64 = tpu.matmul %63, %61, %cst_27 {dimension_numbers = #tpu.dot_dimension_numbers<[1], [0], [0], [1], [0, 0, 1, 1], [], []>} : vector<8x32xbf16>, vector<32x32xbf16>, vector<8x32xf32> -> vector<8x32xf32>
    %65 = vector.broadcast %62 : vector<1x32xf32> to vector<8x32xf32>
    %66 = arith.addf %64, %65 : vector<8x32xf32>
    %cst_28 = arith.constant 0.000000e+00 : f32
    %67 = vector.broadcast %cst_28 : f32 to vector<8x32xf32>
    %68 = arith.maximumf %66, %67 : vector<8x32xf32>
    %c0_29 = arith.constant 0 : index
    %c768 = arith.constant 768 : index
    %69 = vector.load %arg3[%c0_29, %c768] : memref<32x2432xbf16, #tpu.memory_space<vmem>>, vector<32x16xbf16>
    %c0_30 = arith.constant 0 : index
    %c512_31 = arith.constant 512 : index
    %70 = vector.load %arg4[%c0_30, %c512_31] : memref<1x1920xf32, #tpu.memory_space<vmem>>, vector<1x16xf32>
    %71 = arith.truncf %68 : vector<8x32xf32> to vector<8x32xbf16>
    %cst_32 = arith.constant dense<0.000000e+00> : vector<8x16xf32>
    %72 = tpu.matmul %71, %69, %cst_32 {dimension_numbers = #tpu.dot_dimension_numbers<[1], [0], [0], [1], [0, 0, 1, 1], [], []>} : vector<8x32xbf16>, vector<32x16xbf16>, vector<8x16xf32> -> vector<8x16xf32>
    %73 = vector.broadcast %70 : vector<1x16xf32> to vector<8x16xf32>
    %74 = arith.addf %72, %73 : vector<8x16xf32>
    %75 = vector.extract_strided_slice %74 {offsets = [0, 0], sizes = [8, 8], strides = [1, 1]} : vector<8x16xf32> to vector<8x8xf32>
    %76 = arith.subf %29, %75 : vector<8x8xf32>
    %77 = vector.extract_strided_slice %74 {offsets = [0, 8], sizes = [8, 8], strides = [1, 1]} : vector<8x16xf32> to vector<8x8xf32>
    %78 = arith.addf %32, %77 : vector<8x8xf32>
    %c0_33 = arith.constant 0 : index
    %c896 = arith.constant 896 : index
    %79 = vector.load %arg3[%c0_33, %c896] : memref<32x2432xbf16, #tpu.memory_space<vmem>>, vector<8x256xbf16>
    %80 = arith.truncf %76 : vector<8x8xf32> to vector<8x8xbf16>
    %cst_34 = arith.constant dense<0.000000e+00> : vector<8x256xf32>
    %81 = tpu.matmul %80, %79, %cst_34 {dimension_numbers = #tpu.dot_dimension_numbers<[1], [0], [0], [1], [0, 0, 1, 1], [], []>} : vector<8x8xbf16>, vector<8x256xbf16>, vector<8x256xf32> -> vector<8x256xf32>
    %82 = vector.extract_strided_slice %81 {offsets = [0, 0], sizes = [8, 8], strides = [1, 1]} : vector<8x256xf32> to vector<8x8xf32>
    %83 = vector.extract_strided_slice %81 {offsets = [0, 128], sizes = [8, 8], strides = [1, 1]} : vector<8x256xf32> to vector<8x8xf32>
    %84 = arith.maximumf %82, %83 : vector<8x8xf32>
    %c0_35 = arith.constant 0 : index
    %c1152 = arith.constant 1152 : index
    %85 = vector.load %arg3[%c0_35, %c1152] : memref<32x2432xbf16, #tpu.memory_space<vmem>>, vector<8x32xbf16>
    %c0_36 = arith.constant 0 : index
    %c640_37 = arith.constant 640 : index
    %86 = vector.load %arg4[%c0_36, %c640_37] : memref<1x1920xf32, #tpu.memory_space<vmem>>, vector<1x32xf32>
    %87 = arith.truncf %84 : vector<8x8xf32> to vector<8x8xbf16>
    %cst_38 = arith.constant dense<0.000000e+00> : vector<8x32xf32>
    %88 = tpu.matmul %87, %85, %cst_38 {dimension_numbers = #tpu.dot_dimension_numbers<[1], [0], [0], [1], [0, 0, 1, 1], [], []>} : vector<8x8xbf16>, vector<8x32xbf16>, vector<8x32xf32> -> vector<8x32xf32>
    %89 = vector.broadcast %86 : vector<1x32xf32> to vector<8x32xf32>
    %90 = arith.addf %88, %89 : vector<8x32xf32>
    %c0_39 = arith.constant 0 : index
    %c1280 = arith.constant 1280 : index
    %91 = vector.load %arg3[%c0_39, %c1280] : memref<32x2432xbf16, #tpu.memory_space<vmem>>, vector<32x32xbf16>
    %c0_40 = arith.constant 0 : index
    %c768_41 = arith.constant 768 : index
    %92 = vector.load %arg4[%c0_40, %c768_41] : memref<1x1920xf32, #tpu.memory_space<vmem>>, vector<1x32xf32>
    %93 = arith.truncf %90 : vector<8x32xf32> to vector<8x32xbf16>
    %cst_42 = arith.constant dense<0.000000e+00> : vector<8x32xf32>
    %94 = tpu.matmul %93, %91, %cst_42 {dimension_numbers = #tpu.dot_dimension_numbers<[1], [0], [0], [1], [0, 0, 1, 1], [], []>} : vector<8x32xbf16>, vector<32x32xbf16>, vector<8x32xf32> -> vector<8x32xf32>
    %95 = vector.broadcast %92 : vector<1x32xf32> to vector<8x32xf32>
    %96 = arith.addf %94, %95 : vector<8x32xf32>
    %cst_43 = arith.constant 0.000000e+00 : f32
    %97 = vector.broadcast %cst_43 : f32 to vector<8x32xf32>
    %98 = arith.maximumf %96, %97 : vector<8x32xf32>
    %c0_44 = arith.constant 0 : index
    %c1408 = arith.constant 1408 : index
    %99 = vector.load %arg3[%c0_44, %c1408] : memref<32x2432xbf16, #tpu.memory_space<vmem>>, vector<32x32xbf16>
    %c0_45 = arith.constant 0 : index
    %c896_46 = arith.constant 896 : index
    %100 = vector.load %arg4[%c0_45, %c896_46] : memref<1x1920xf32, #tpu.memory_space<vmem>>, vector<1x32xf32>
    %101 = arith.truncf %98 : vector<8x32xf32> to vector<8x32xbf16>
    %cst_47 = arith.constant dense<0.000000e+00> : vector<8x32xf32>
    %102 = tpu.matmul %101, %99, %cst_47 {dimension_numbers = #tpu.dot_dimension_numbers<[1], [0], [0], [1], [0, 0, 1, 1], [], []>} : vector<8x32xbf16>, vector<32x32xbf16>, vector<8x32xf32> -> vector<8x32xf32>
    %103 = vector.broadcast %100 : vector<1x32xf32> to vector<8x32xf32>
    %104 = arith.addf %102, %103 : vector<8x32xf32>
    %cst_48 = arith.constant 0.000000e+00 : f32
    %105 = vector.broadcast %cst_48 : f32 to vector<8x32xf32>
    %106 = arith.maximumf %104, %105 : vector<8x32xf32>
    %c0_49 = arith.constant 0 : index
    %c1536 = arith.constant 1536 : index
    %107 = vector.load %arg3[%c0_49, %c1536] : memref<32x2432xbf16, #tpu.memory_space<vmem>>, vector<32x32xbf16>
    %c0_50 = arith.constant 0 : index
    %c1024 = arith.constant 1024 : index
    %108 = vector.load %arg4[%c0_50, %c1024] : memref<1x1920xf32, #tpu.memory_space<vmem>>, vector<1x32xf32>
    %109 = arith.truncf %106 : vector<8x32xf32> to vector<8x32xbf16>
    %cst_51 = arith.constant dense<0.000000e+00> : vector<8x32xf32>
    %110 = tpu.matmul %109, %107, %cst_51 {dimension_numbers = #tpu.dot_dimension_numbers<[1], [0], [0], [1], [0, 0, 1, 1], [], []>} : vector<8x32xbf16>, vector<32x32xbf16>, vector<8x32xf32> -> vector<8x32xf32>
    %111 = vector.broadcast %108 : vector<1x32xf32> to vector<8x32xf32>
    %112 = arith.addf %110, %111 : vector<8x32xf32>
    %cst_52 = arith.constant 0.000000e+00 : f32
    %113 = vector.broadcast %cst_52 : f32 to vector<8x32xf32>
    %114 = arith.maximumf %112, %113 : vector<8x32xf32>
    %c0_53 = arith.constant 0 : index
    %c1664 = arith.constant 1664 : index
    %115 = vector.load %arg3[%c0_53, %c1664] : memref<32x2432xbf16, #tpu.memory_space<vmem>>, vector<32x16xbf16>
    %c0_54 = arith.constant 0 : index
    %c1152_55 = arith.constant 1152 : index
    %116 = vector.load %arg4[%c0_54, %c1152_55] : memref<1x1920xf32, #tpu.memory_space<vmem>>, vector<1x16xf32>
    %117 = arith.truncf %114 : vector<8x32xf32> to vector<8x32xbf16>
    %cst_56 = arith.constant dense<0.000000e+00> : vector<8x16xf32>
    %118 = tpu.matmul %117, %115, %cst_56 {dimension_numbers = #tpu.dot_dimension_numbers<[1], [0], [0], [1], [0, 0, 1, 1], [], []>} : vector<8x32xbf16>, vector<32x16xbf16>, vector<8x16xf32> -> vector<8x16xf32>
    %119 = vector.broadcast %116 : vector<1x16xf32> to vector<8x16xf32>
    %120 = arith.addf %118, %119 : vector<8x16xf32>
    %121 = vector.extract_strided_slice %120 {offsets = [0, 0], sizes = [8, 8], strides = [1, 1]} : vector<8x16xf32> to vector<8x8xf32>
    %122 = arith.subf %76, %121 : vector<8x8xf32>
    %123 = vector.extract_strided_slice %120 {offsets = [0, 8], sizes = [8, 8], strides = [1, 1]} : vector<8x16xf32> to vector<8x8xf32>
    %124 = arith.addf %78, %123 : vector<8x8xf32>
    %c0_57 = arith.constant 0 : index
    %c1792 = arith.constant 1792 : index
    %125 = vector.load %arg3[%c0_57, %c1792] : memref<32x2432xbf16, #tpu.memory_space<vmem>>, vector<8x32xbf16>
    %c0_58 = arith.constant 0 : index
    %c1280_59 = arith.constant 1280 : index
    %126 = vector.load %arg4[%c0_58, %c1280_59] : memref<1x1920xf32, #tpu.memory_space<vmem>>, vector<1x32xf32>
    %127 = arith.truncf %122 : vector<8x8xf32> to vector<8x8xbf16>
    %cst_60 = arith.constant dense<0.000000e+00> : vector<8x32xf32>
    %128 = tpu.matmul %127, %125, %cst_60 {dimension_numbers = #tpu.dot_dimension_numbers<[1], [0], [0], [1], [0, 0, 1, 1], [], []>} : vector<8x8xbf16>, vector<8x32xbf16>, vector<8x32xf32> -> vector<8x32xf32>
    %129 = vector.broadcast %126 : vector<1x32xf32> to vector<8x32xf32>
    %130 = arith.addf %128, %129 : vector<8x32xf32>
    %c0_61 = arith.constant 0 : index
    %c1920 = arith.constant 1920 : index
    %131 = vector.load %arg3[%c0_61, %c1920] : memref<32x2432xbf16, #tpu.memory_space<vmem>>, vector<32x32xbf16>
    %c0_62 = arith.constant 0 : index
    %c1408_63 = arith.constant 1408 : index
    %132 = vector.load %arg4[%c0_62, %c1408_63] : memref<1x1920xf32, #tpu.memory_space<vmem>>, vector<1x32xf32>
    %133 = arith.truncf %130 : vector<8x32xf32> to vector<8x32xbf16>
    %cst_64 = arith.constant dense<0.000000e+00> : vector<8x32xf32>
    %134 = tpu.matmul %133, %131, %cst_64 {dimension_numbers = #tpu.dot_dimension_numbers<[1], [0], [0], [1], [0, 0, 1, 1], [], []>} : vector<8x32xbf16>, vector<32x32xbf16>, vector<8x32xf32> -> vector<8x32xf32>
    %135 = vector.broadcast %132 : vector<1x32xf32> to vector<8x32xf32>
    %136 = arith.addf %134, %135 : vector<8x32xf32>
    %cst_65 = arith.constant 0.000000e+00 : f32
    %137 = vector.broadcast %cst_65 : f32 to vector<8x32xf32>
    %138 = arith.maximumf %136, %137 : vector<8x32xf32>
    %c0_66 = arith.constant 0 : index
    %c2048 = arith.constant 2048 : index
    %139 = vector.load %arg3[%c0_66, %c2048] : memref<32x2432xbf16, #tpu.memory_space<vmem>>, vector<32x32xbf16>
    %c0_67 = arith.constant 0 : index
    %c1536_68 = arith.constant 1536 : index
    %140 = vector.load %arg4[%c0_67, %c1536_68] : memref<1x1920xf32, #tpu.memory_space<vmem>>, vector<1x32xf32>
    %141 = arith.truncf %138 : vector<8x32xf32> to vector<8x32xbf16>
    %cst_69 = arith.constant dense<0.000000e+00> : vector<8x32xf32>
    %142 = tpu.matmul %141, %139, %cst_69 {dimension_numbers = #tpu.dot_dimension_numbers<[1], [0], [0], [1], [0, 0, 1, 1], [], []>} : vector<8x32xbf16>, vector<32x32xbf16>, vector<8x32xf32> -> vector<8x32xf32>
    %143 = vector.broadcast %140 : vector<1x32xf32> to vector<8x32xf32>
    %144 = arith.addf %142, %143 : vector<8x32xf32>
    %cst_70 = arith.constant 0.000000e+00 : f32
    %145 = vector.broadcast %cst_70 : f32 to vector<8x32xf32>
    %146 = arith.maximumf %144, %145 : vector<8x32xf32>
    %c0_71 = arith.constant 0 : index
    %c2176 = arith.constant 2176 : index
    %147 = vector.load %arg3[%c0_71, %c2176] : memref<32x2432xbf16, #tpu.memory_space<vmem>>, vector<32x32xbf16>
    %c0_72 = arith.constant 0 : index
    %c1664_73 = arith.constant 1664 : index
    %148 = vector.load %arg4[%c0_72, %c1664_73] : memref<1x1920xf32, #tpu.memory_space<vmem>>, vector<1x32xf32>
    %149 = arith.truncf %146 : vector<8x32xf32> to vector<8x32xbf16>
    %cst_74 = arith.constant dense<0.000000e+00> : vector<8x32xf32>
    %150 = tpu.matmul %149, %147, %cst_74 {dimension_numbers = #tpu.dot_dimension_numbers<[1], [0], [0], [1], [0, 0, 1, 1], [], []>} : vector<8x32xbf16>, vector<32x32xbf16>, vector<8x32xf32> -> vector<8x32xf32>
    %151 = vector.broadcast %148 : vector<1x32xf32> to vector<8x32xf32>
    %152 = arith.addf %150, %151 : vector<8x32xf32>
    %cst_75 = arith.constant 0.000000e+00 : f32
    %153 = vector.broadcast %cst_75 : f32 to vector<8x32xf32>
    %154 = arith.maximumf %152, %153 : vector<8x32xf32>
    %c0_76 = arith.constant 0 : index
    %c2304 = arith.constant 2304 : index
    %155 = vector.load %arg3[%c0_76, %c2304] : memref<32x2432xbf16, #tpu.memory_space<vmem>>, vector<32x16xbf16>
    %c0_77 = arith.constant 0 : index
    %c1792_78 = arith.constant 1792 : index
    %156 = vector.load %arg4[%c0_77, %c1792_78] : memref<1x1920xf32, #tpu.memory_space<vmem>>, vector<1x16xf32>
    %157 = arith.truncf %154 : vector<8x32xf32> to vector<8x32xbf16>
    %cst_79 = arith.constant dense<0.000000e+00> : vector<8x16xf32>
    %158 = tpu.matmul %157, %155, %cst_79 {dimension_numbers = #tpu.dot_dimension_numbers<[1], [0], [0], [1], [0, 0, 1, 1], [], []>} : vector<8x32xbf16>, vector<32x16xbf16>, vector<8x16xf32> -> vector<8x16xf32>
    %159 = vector.broadcast %156 : vector<1x16xf32> to vector<8x16xf32>
    %160 = arith.addf %158, %159 : vector<8x16xf32>
    %161 = vector.extract_strided_slice %160 {offsets = [0, 8], sizes = [8, 8], strides = [1, 1]} : vector<8x16xf32> to vector<8x8xf32>
    %162 = arith.addf %124, %161 : vector<8x8xf32>
    %163 = tpu.iota {dimensions = array<i32: 1>} : vector<8x8xi32>
    %c4_i32 = arith.constant 4 : i32
    %164 = vector.broadcast %c4_i32 : i32 to vector<8x8xi32>
    %165 = arith.cmpi slt, %163, %164 : vector<8x8xi32>
    %cst_80 = arith.constant 2.000000e+01 : f32
    %166 = vector.broadcast %cst_80 : f32 to vector<8x8xf32>
    %167 = arith.cmpf ogt, %162, %166 : vector<8x8xf32>
    %cst_81 = arith.constant 2.000000e+01 : f32
    %168 = vector.broadcast %cst_81 : f32 to vector<8x8xf32>
    %169 = arith.minimumf %162, %168 : vector<8x8xf32>
    %170 = math.exp %169 : vector<8x8xf32>
    %171 = math.log1p %170 : vector<8x8xf32>
    %172 = arith.select %167, %162, %171 : vector<8x8xi1>, vector<8x8xf32>
    %173 = vector.broadcast %3 : vector<8x1xf32> to vector<8x8xf32>
    %174 = arith.subf %162, %173 : vector<8x8xf32>
    %175 = arith.select %165, %174, %172 : vector<8x8xi1>, vector<8x8xf32>
    %176 = vector.broadcast %4 : vector<8x1xf32> to vector<8x8xf32>
    %177 = arith.mulf %175, %176 : vector<8x8xf32>
    %178 = vector.broadcast %21 : vector<8x1xf32> to vector<8x8xf32>
    %179 = arith.mulf %177, %178 : vector<8x8xf32>
    %cst_82 = arith.constant 0.000000e+00 : f32
    %180 = vector.shape_cast %8 : vector<8x1xf32> to vector<8x1xf32>
    %181 = vector.broadcast %180 : vector<8x1xf32> to vector<8x8xf32>
    %182 = vector.broadcast %cst_82 : f32 to vector<8x8xf32>
    %183 = arith.select %165, %181, %182 : vector<8x8xi1>, vector<8x8xf32>
    %184 = arith.addf %179, %183 : vector<8x8xf32>
    %c0_83 = arith.constant 0 : index
    %c0_84 = arith.constant 0 : index
    %185 = vector.load %arg5[%c0_83, %c0_84] : memref<8x8xf32, #tpu.memory_space<vmem>>, vector<8x8xf32>
    tpu.vector_store %arg5[%c0_83, %c0_84], %184 {strides = array<i32>} : memref<8x8xf32, #tpu.memory_space<vmem>>, vector<8x8xf32>,
    return
  }
  func.func @transform_0(%arg0: i32) -> (i32, i32) {
    %c0_i32 = arith.constant 0 : i32
    %c0_i32_0 = arith.constant 0 : i32
    return %arg0, %c0_i32 : i32, i32
  }
  func.func @transform_1(%arg0: i32) -> (i32, i32) {
    %c0_i32 = arith.constant 0 : i32
    %c0_i32_0 = arith.constant 0 : i32
    return %arg0, %c0_i32 : i32, i32
  }
  func.func @transform_2(%arg0: i32) -> (i32, i32) {
    %c0_i32 = arith.constant 0 : i32
    %c0_i32_0 = arith.constant 0 : i32
    %c0_i32_1 = arith.constant 0 : i32
    return %c0_i32, %c0_i32_0 : i32, i32
  }
  func.func @transform_3(%arg0: i32) -> (i32, i32) {
    %c0_i32 = arith.constant 0 : i32
    %c0_i32_0 = arith.constant 0 : i32
    %c0_i32_1 = arith.constant 0 : i32
    return %c0_i32, %c0_i32_0 : i32, i32
  }
  func.func @transform_4(%arg0: i32) -> (i32, i32) {
    %c0_i32 = arith.constant 0 : i32
    %c0_i32_0 = arith.constant 0 : i32
    return %arg0, %c0_i32 : i32, i32
  }
}

</mosaic_0001>

<llo_original>
// kernel: tpu_custom_call.1
$region0: #{tpu_custom_call.1}
  #allocation0 [shape = 'u32[]', space=smem, size = 0x4, offset = 0x4, fixed_abs, tag = 'smem constant byte address 0x4 - core index']
  #allocation1 [shape = 'u32[144,128]{1,0:T(1,128)}', space=vmem, size = 0x12000, scoped, tag = 'internal scratch']
  %s0 = inlined_call_operand.vmem [shape: f32[8,8], index: 0, kind: input, shape index: {}]
  %s1 = inlined_call_operand.vmem [shape: f32[8,4], index: 1, kind: input, shape index: {}]
  %s2 = inlined_call_operand.hbm [shape: bf16[32,2432], index: 2, kind: input, shape index: {}]
  %s3 = inlined_call_operand.vmem [shape: f32[1,1920], index: 3, kind: input, shape index: {}]
  %s4 = inlined_call_operand.hbm [shape: f32[8,8], index: 4, kind: output, shape index: {}]
  %s5 = sld [smem:[#allocation0]]
  $region30: #{tpu_custom_call.1} parent=0
    _
  %s7 = ssub.s32 1, %s5
  %s8 = scalar_select 0, %s7, %s5
  $region1: #{tpu_custom_call.1} parent=0
    #allocation2 [shape = 'u8[155648]{0}', space=vmem, size = 0x26000, scoped, tag = 'input window, operand 2, single buffered']
    #allocation3 [shape = 's32[1]{0}', space=sflag, size = 0x4, scoped, tag = 'scoped memory for tpu_custom_call.1']
    #allocation4 [shape = 's32[1]{0}', space=sflag, size = 0x4, scoped, tag = 'scoped memory for tpu_custom_call.1']
    #allocation5 [shape = 'u8[4096]{0}', space=vmem, size = 0x1000, scoped, tag = 'output window, operand 0, single buffered']
    %9 = vsyncpa [#allocation3], 0
    %10 = vsyncpa [#allocation4], 0
    // Predicated region
    $region2: #{tpu_custom_call.1} parent=1 // pred_check
      _
    $region3: #{tpu_custom_call.1} parent=1 // pred_check_branch
      %12 = sbr.rel (0) target = $region5
    $region4: #{tpu_custom_call.1} parent=1 // pred_region
      _
    $region5: #{tpu_custom_call.1} parent=1 // pred_fallthru
      _
    // Predicated region
    $region6: #{tpu_custom_call.1} parent=1 // pred_check
      _
    $region7: #{tpu_custom_call.1} parent=1 // pred_check_branch
      %14 = sbr.rel (0) target = $region9
    $region8: #{tpu_custom_call.1} parent=1 // pred_region
      _
    $region9: #{tpu_custom_call.1} parent=1 // pred_fallthru
      _
    // Predicated region
    $region10: #{tpu_custom_call.1} parent=1 // pred_check
      _
    $region11: #{tpu_custom_call.1} parent=1 // pred_check_branch
      %16 = sbr.rel (0) target = $region13
    $region12: #{tpu_custom_call.1} parent=1 // pred_region
      %s18 = ssub.s32 4864, 4864
      %19 = vsyncadd [#allocation3], %s18
      %s20 = sshll.u32 [#allocation2], 4
      %s21 = int_to_ptr.vmem [resolvable:$true] %s20
      %26 = dma.hbm_to_vmem [thread:$0]  %s2, 4864, %s21, [#allocation3], 1216, 1216, 76
    $region13: #{tpu_custom_call.1} parent=1 // pred_fallthru
      _
    // Predicated region
    $region14: #{tpu_custom_call.1} parent=1 // pred_check
      _
    $region15: #{tpu_custom_call.1} parent=1 // pred_check_branch
      %28 = sbr.rel (0) target = $region17
    $region16: #{tpu_custom_call.1} parent=1 // pred_region
      _
    $region17: #{tpu_custom_call.1} parent=1 // pred_fallthru
      _
    // Predicated region
    $region18: #{tpu_custom_call.1} parent=1 // pred_check
      _
    $region19: #{tpu_custom_call.1} parent=1 // pred_check_branch
      %30 = sbr.rel (0) target = $region21
    $region20: #{tpu_custom_call.1} parent=1 // pred_region
      %31 = dma.done [#allocation3], 4864
    $region21: #{tpu_custom_call.1} parent=1 // pred_fallthru
      _
    %v33 = vld [vmem:[%s0] sm:$0xff]
    %v34 = vld [vmem:[%s1] sm:$0xff]
    %vm35 = vcmask 64512
    %v36 = vsel %vm35, %v33, 0.0
    %37 = vadd.xlane.f32.xlu0 %v36
    %v38 = vpop.xlane.xlu0 %37
    %v39 = vrcp.pop 8.0
    %v40 = vmul.f32 %v38, %v39
    %v41 = vsub.f32 %v33, %v40
    %v42 = vmul.f32 %v41, %v41
    %v43 = vsel %vm35, %v42, 0.0
    %44 = vadd.xlane.f32.xlu0 %v43
    %v45 = vpop.xlane.xlu0 %44
    %v46 = vmul.f32 %v45, %v39
    %v47 = vadd.f32 %v46, 1e-05
    %v48 = vrsqrt.pop %v47
    %v49 = vmul.f32 %v47, %v48
    %v50 = vmul.f32 %v41, %v48
    %52 = vset.pattern.permute.xlu0 0
    %53 = vperm.xlu0 %52, %v34
    %v54 = vpop.permute.xlu0 %53
    %v56 = vmul.f32 %v50, %v54
    %57 = vset.pattern.permute.xlu0 1
    %58 = vperm.xlu0 %57, %v34
    %v59 = vpop.permute.xlu0 %58
    %v61 = vadd.f32 %v56, %v59
    %63 = vset.pattern.permute.xlu0 7
    %64 = vperm.xlu0 %63, %v61
    %v65 = vpop.permute.xlu0 %64
    %v67 = vld [vmem:[#allocation2] sm:$0xff]
    %v68 = vpack.c.bf16 %v61, %v61
    %v70 = vunpack.c.l.b16 %v67
    %v71 = vunpack.c.h.b16 %v67
    %v72 = vpack.c.b16 %v70, %v70
    %v73 = vpack.c.b16 %v71, %v71
    %v75 = vsel %vm35, %v68, 0
    %vm77 = vcmask 1043456
    %v79 = vsel %vm77, %v72, 0
    %v82 = vsel %vm77, %v73, 0
    %84 = vmatprep.subr.bf16.mxu0 %v82
    %85 = vmatpush1.bf16.msra.mxu0 %v79
    %86 = vmatprep.subr.bf16.mxu0 0
    %87 = vmatpush1.bf16.msra.mxu0 0
    %88 = vmatprep.subr.bf16.mxu0 0
    %89 = vmatpush1.bf16.msra.mxu0 0
    %90 = vmatprep.subr.bf16.mxu0 0
    %91 = vmatpush1.bf16.msra.mxu0 0
    %92 = vmatprep.subr.bf16.mxu0 0
    %93 = vmatpush1.bf16.msra.mxu0 0
    %94 = vmatprep.subr.bf16.mxu0 0
    %95 = vmatpush1.bf16.msra.mxu0 0
    %96 = vmatprep.subr.bf16.mxu0 0
    %97 = vmatpush1.bf16.msra.mxu0 0
    %98 = vmatprep.subr.bf16.mxu0 0
    %99 = vmatpush1.bf16.msra.mxu0 0
    %100 = vmatprep.subr.bf16.mxu0 0
    %101 = vmatpush1.bf16.msra.mxu0 0
    %102 = vmatprep.subr.bf16.mxu0 0
    %103 = vmatpush1.bf16.msra.mxu0 0
    %104 = vmatprep.subr.bf16.mxu0 0
    %105 = vmatpush1.bf16.msra.mxu0 0
    %106 = vmatprep.subr.bf16.mxu0 0
    %107 = vmatpush1.bf16.msra.mxu0 0
    %108 = vmatprep.subr.bf16.mxu0 0
    %109 = vmatpush1.bf16.msra.mxu0 0
    %110 = vmatprep.subr.bf16.mxu0 0
    %111 = vmatpush1.bf16.msra.mxu0 0
    %112 = vmatprep.subr.bf16.mxu0 0
    %113 = vmatpush1.bf16.msra.mxu0 0
    %114 = vmatprep.subr.bf16.mxu0 0
    %115 = vmatpush1.bf16.msra.mxu0 0
    %116 = vmatprep.mubr.bf16.mxu0 0
    %117 = vmatmul.mubr.bf16.gmra.mrb[0].mxu0 %v75
    %v118 = vpop.f32.mrb[0].mxu0
    %v119 = vadd.f32 0.0, %v118
    %v120 = vpop.f32.mrb[0].mxu0
    %v121 = vadd.f32 0.0, %v120
    %v122 = vpop.f32.mrb[0].mxu0
    %v123 = vpop.f32.mrb[0].mxu0
    %124 = vdwg.mxu0
    %v125 = vmax.f32 %v119, %v121
    %v126 = vld [vmem:[#allocation2 + $0x8] sm:$0xf]
    %v127 = vld [vmem:[%s3] sm:$0x1]
    %v128 = vpack.c.bf16 %v125, %v125
    %v130 = vlaneseq
    %v131 = vshrl.u32 %v130, 7
    %v132 = vsub.s32 0, %v131
    %v133 = vrot.slane %v127, %v132
    %v136 = vsel %vm35, %v128, 0
    %v139 = vsel %vm77, %v126, 0
    %141 = vmatprep.subr.bf16.mxu0 0
    %142 = vmatpush1.bf16.msra.mxu0 %v139
    %143 = vmatprep.subr.bf16.mxu0 0
    %144 = vmatpush1.bf16.msra.mxu0 0
    %145 = vmatprep.subr.bf16.mxu0 0
    %146 = vmatpush1.bf16.msra.mxu0 0
    %147 = vmatprep.subr.bf16.mxu0 0
    %148 = vmatpush1.bf16.msra.mxu0 0
    %149 = vmatprep.subr.bf16.mxu0 0
    %150 = vmatpush1.bf16.msra.mxu0 0
    %151 = vmatprep.subr.bf16.mxu0 0
    %152 = vmatpush1.bf16.msra.mxu0 0
    %153 = vmatprep.subr.bf16.mxu0 0
    %154 = vmatpush1.bf16.msra.mxu0 0
    %155 = vmatprep.subr.bf16.mxu0 0
    %156 = vmatpush1.bf16.msra.mxu0 0
    %157 = vmatprep.subr.bf16.mxu0 0
    %158 = vmatpush1.bf16.msra.mxu0 0
    %159 = vmatprep.subr.bf16.mxu0 0
    %160 = vmatpush1.bf16.msra.mxu0 0
    %161 = vmatprep.subr.bf16.mxu0 0
    %162 = vmatpush1.bf16.msra.mxu0 0
    %163 = vmatprep.subr.bf16.mxu0 0
    %164 = vmatpush1.bf16.msra.mxu0 0
    %165 = vmatprep.subr.bf16.mxu0 0
    %166 = vmatpush1.bf16.msra.mxu0 0
    %167 = vmatprep.subr.bf16.mxu0 0
    %168 = vmatpush1.bf16.msra.mxu0 0
    %169 = vmatprep.subr.bf16.mxu0 0
    %170 = vmatpush1.bf16.msra.mxu0 0
    %171 = vmatprep.subr.bf16.mxu0 0
    %172 = vmatpush1.bf16.msra.mxu0 0
    %173 = vmatprep.mubr.bf16.mxu0 0
    %174 = vmatmul.mubr.bf16.gmra.mrb[0].mxu0 %v136
    %v175 = vpop.f32.mrb[0].mxu0
    %v176 = vadd.f32 %v133, %v175
    %v177 = vpop.f32.mrb[0].mxu0
    %v178 = vpop.f32.mrb[0].mxu0
    %v179 = vpop.f32.mrb[0].mxu0
    %180 = vdwg.mxu0
    %v181 = vld [vmem:[#allocation2 + $0xc] sm:$0xf]
    %v182 = vld [vmem:[#allocation2 + $0x58] sm:$0xf]
    %v183 = vld [vmem:[#allocation2 + $0xa4] sm:$0xf]
    %v184 = vld [vmem:[#allocation2 + $0xf0] sm:$0xf]
    %v185 = vld [vmem:[%s3 + $0x1] sm:$0x1]
    %v186 = vpack.c.bf16 %v176, %v176
    %v188 = vlaneseq
    %v189 = vshrl.u32 %v188, 7
    %v190 = vsub.s32 0, %v189
    %v191 = vrot.slane %v185, %v190
    %v197 = vunpack.c.l.b16 %v181
    %v198 = vunpack.c.l.b16 %v182
    %v199 = vunpack.c.l.b16 %v183
    %v200 = vunpack.c.l.b16 %v184
    %v201 = vpack.c.b16 %v198, %v197
    %v202 = vpack.c.b16 %v200, %v199
    %vm205 = vcmask 261120
    %v207 = vsel %vm205, %v186, 0
    %209 = vmatprep.subr.bf16.mxu0 0
    %210 = vmatpush1.bf16.msra.mxu0 %v201
    %211 = vmatprep.subr.bf16.mxu0 0
    %212 = vmatpush1.bf16.msra.mxu0 %v202
    %213 = vmatprep.subr.bf16.mxu0 0
    %214 = vmatpush1.bf16.msra.mxu0 0
    %215 = vmatprep.subr.bf16.mxu0 0
    %216 = vmatpush1.bf16.msra.mxu0 0
    %217 = vmatprep.subr.bf16.mxu0 0
    %218 = vmatpush1.bf16.msra.mxu0 0
    %219 = vmatprep.subr.bf16.mxu0 0
    %220 = vmatpush1.bf16.msra.mxu0 0
    %221 = vmatprep.subr.bf16.mxu0 0
    %222 = vmatpush1.bf16.msra.mxu0 0
    %223 = vmatprep.subr.bf16.mxu0 0
    %224 = vmatpush1.bf16.msra.mxu0 0
    %225 = vmatprep.subr.bf16.mxu0 0
    %226 = vmatpush1.bf16.msra.mxu0 0
    %227 = vmatprep.subr.bf16.mxu0 0
    %228 = vmatpush1.bf16.msra.mxu0 0
    %229 = vmatprep.subr.bf16.mxu0 0
    %230 = vmatpush1.bf16.msra.mxu0 0
    %231 = vmatprep.subr.bf16.mxu0 0
    %232 = vmatpush1.bf16.msra.mxu0 0
    %233 = vmatprep.subr.bf16.mxu0 0
    %234 = vmatpush1.bf16.msra.mxu0 0
    %235 = vmatprep.subr.bf16.mxu0 0
    %236 = vmatpush1.bf16.msra.mxu0 0
    %237 = vmatprep.subr.bf16.mxu0 0
    %238 = vmatpush1.bf16.msra.mxu0 0
    %239 = vmatprep.subr.bf16.mxu0 0
    %240 = vmatpush1.bf16.msra.mxu0 0
    %241 = vmatprep.mubr.bf16.mxu0 0
    %242 = vmatmul.mubr.bf16.gmra.mrb[0].mxu0 %v207
    %v243 = vpop.f32.mrb[0].mxu0
    %v244 = vadd.f32 %v191, %v243
    %v245 = vpop.f32.mrb[0].mxu0
    %v246 = vpop.f32.mrb[0].mxu0
    %v247 = vpop.f32.mrb[0].mxu0
    %248 = vdwg.mxu0
    %v249 = vmax.f32 %v244, 0.0
    %v250 = vld [vmem:[#allocation2 + $0x10] sm:$0xf]
    %v251 = vld [vmem:[#allocation2 + $0x5c] sm:$0xf]
    %v252 = vld [vmem:[#allocation2 + $0xa8] sm:$0xf]
    %v253 = vld [vmem:[#allocation2 + $0xf4] sm:$0xf]
    %v254 = vld [vmem:[%s3 + $0x2] sm:$0x1]
    %v255 = vpack.c.bf16 %v249, %v249
    %v257 = vlaneseq
    %v258 = vshrl.u32 %v257, 7
    %v259 = vsub.s32 0, %v258
    %v260 = vrot.slane %v254, %v259
    %v266 = vunpack.c.l.b16 %v250
    %v267 = vunpack.c.l.b16 %v251
    %v268 = vunpack.c.l.b16 %v252
    %v269 = vunpack.c.l.b16 %v253
    %v270 = vpack.c.b16 %v267, %v266
    %v271 = vpack.c.b16 %v269, %v268
    %v275 = vsel %vm205, %v255, 0
    %277 = vmatprep.subr.bf16.mxu0 0
    %278 = vmatpush1.bf16.msra.mxu0 %v270
    %279 = vmatprep.subr.bf16.mxu0 0
    %280 = vmatpush1.bf16.msra.mxu0 %v271
    %281 = vmatprep.subr.bf16.mxu0 0
    %282 = vmatpush1.bf16.msra.mxu0 0
    %283 = vmatprep.subr.bf16.mxu0 0
    %284 = vmatpush1.bf16.msra.mxu0 0
    %285 = vmatprep.subr.bf16.mxu0 0
    %286 = vmatpush1.bf16.msra.mxu0 0
    %287 = vmatprep.subr.bf16.mxu0 0
    %288 = vmatpush1.bf16.msra.mxu0 0
    %289 = vmatprep.subr.bf16.mxu0 0
    %290 = vmatpush1.bf16.msra.mxu0 0
    %291 = vmatprep.subr.bf16.mxu0 0
    %292 = vmatpush1.bf16.msra.mxu0 0
    %293 = vmatprep.subr.bf16.mxu0 0
    %294 = vmatpush1.bf16.msra.mxu0 0
    %295 = vmatprep.subr.bf16.mxu0 0
    %296 = vmatpush1.bf16.msra.mxu0 0
    %297 = vmatprep.subr.bf16.mxu0 0
    %298 = vmatpush1.bf16.msra.mxu0 0
    %299 = vmatprep.subr.bf16.mxu0 0
    %300 = vmatpush1.bf16.msra.mxu0 0
    %301 = vmatprep.subr.bf16.mxu0 0
    %302 = vmatpush1.bf16.msra.mxu0 0
    %303 = vmatprep.subr.bf16.mxu0 0
    %304 = vmatpush1.bf16.msra.mxu0 0
    %305 = vmatprep.subr.bf16.mxu0 0
    %306 = vmatpush1.bf16.msra.mxu0 0
    %307 = vmatprep.subr.bf16.mxu0 0
    %308 = vmatpush1.bf16.msra.mxu0 0
    %309 = vmatprep.mubr.bf16.mxu0 0
    %310 = vmatmul.mubr.bf16.gmra.mrb[0].mxu0 %v275
    %v311 = vpop.f32.mrb[0].mxu0
    %v312 = vadd.f32 %v260, %v311
    %v313 = vpop.f32.mrb[0].mxu0
    %v314 = vpop.f32.mrb[0].mxu0
    %v315 = vpop.f32.mrb[0].mxu0
    %316 = vdwg.mxu0
    %v317 = vmax.f32 %v312, 0.0
    %v318 = vld [vmem:[#allocation2 + $0x14] sm:$0xf]
    %v319 = vld [vmem:[#allocation2 + $0x60] sm:$0xf]
    %v320 = vld [vmem:[#allocation2 + $0xac] sm:$0xf]
    %v321 = vld [vmem:[#allocation2 + $0xf8] sm:$0xf]
    %v322 = vld [vmem:[%s3 + $0x3] sm:$0x1]
    %v323 = vpack.c.bf16 %v317, %v317
    %v325 = vlaneseq
    %v326 = vshrl.u32 %v325, 7
    %v327 = vsub.s32 0, %v326
    %v328 = vrot.slane %v322, %v327
    %v334 = vunpack.c.l.b16 %v318
    %v335 = vunpack.c.l.b16 %v319
    %v336 = vunpack.c.l.b16 %v320
    %v337 = vunpack.c.l.b16 %v321
    %v338 = vpack.c.b16 %v335, %v334
    %v339 = vpack.c.b16 %v337, %v336
    %v343 = vsel %vm205, %v323, 0
    %345 = vmatprep.subr.bf16.mxu0 0
    %346 = vmatpush1.bf16.msra.mxu0 %v338
    %347 = vmatprep.subr.bf16.mxu0 0
    %348 = vmatpush1.bf16.msra.mxu0 %v339
    %349 = vmatprep.subr.bf16.mxu0 0
    %350 = vmatpush1.bf16.msra.mxu0 0
    %351 = vmatprep.subr.bf16.mxu0 0
    %352 = vmatpush1.bf16.msra.mxu0 0
    %353 = vmatprep.subr.bf16.mxu0 0
    %354 = vmatpush1.bf16.msra.mxu0 0
    %355 = vmatprep.subr.bf16.mxu0 0
    %356 = vmatpush1.bf16.msra.mxu0 0
    %357 = vmatprep.subr.bf16.mxu0 0
    %358 = vmatpush1.bf16.msra.mxu0 0
    %359 = vmatprep.subr.bf16.mxu0 0
    %360 = vmatpush1.bf16.msra.mxu0 0
    %361 = vmatprep.subr.bf16.mxu0 0
    %362 = vmatpush1.bf16.msra.mxu0 0
    %363 = vmatprep.subr.bf16.mxu0 0
    %364 = vmatpush1.bf16.msra.mxu0 0
    %365 = vmatprep.subr.bf16.mxu0 0
    %366 = vmatpush1.bf16.msra.mxu0 0
    %367 = vmatprep.subr.bf16.mxu0 0
    %368 = vmatpush1.bf16.msra.mxu0 0
    %369 = vmatprep.subr.bf16.mxu0 0
    %370 = vmatpush1.bf16.msra.mxu0 0
    %371 = vmatprep.subr.bf16.mxu0 0
    %372 = vmatpush1.bf16.msra.mxu0 0
    %373 = vmatprep.subr.bf16.mxu0 0
    %374 = vmatpush1.bf16.msra.mxu0 0
    %375 = vmatprep.subr.bf16.mxu0 0
    %376 = vmatpush1.bf16.msra.mxu0 0
    %377 = vmatprep.mubr.bf16.mxu0 0
    %378 = vmatmul.mubr.bf16.gmra.mrb[0].mxu0 %v343
    %v379 = vpop.f32.mrb[0].mxu0
    %v380 = vadd.f32 %v328, %v379
    %v381 = vpop.f32.mrb[0].mxu0
    %v382 = vpop.f32.mrb[0].mxu0
    %v383 = vpop.f32.mrb[0].mxu0
    %384 = vdwg.mxu0
    %v385 = vmax.f32 %v380, 0.0
    %v386 = vld [vmem:[#allocation2 + $0x18] sm:$0xf]
    %v387 = vld [vmem:[#allocation2 + $0x64] sm:$0xf]
    %v388 = vld [vmem:[#allocation2 + $0xb0] sm:$0xf]
    %v389 = vld [vmem:[#allocation2 + $0xfc] sm:$0xf]
    %v390 = vld [vmem:[%s3 + $0x4] sm:$0x1]
    %v391 = vpack.c.bf16 %v385, %v385
    %v393 = vlaneseq
    %v394 = vshrl.u32 %v393, 7
    %v395 = vsub.s32 0, %v394
    %v396 = vrot.slane %v390, %v395
    %v402 = vunpack.c.l.b16 %v386
    %v403 = vunpack.c.l.b16 %v387
    %v404 = vunpack.c.l.b16 %v388
    %v405 = vunpack.c.l.b16 %v389
    %v406 = vpack.c.b16 %v403, %v402
    %v407 = vpack.c.b16 %v405, %v404
    %v411 = vsel %vm205, %v391, 0
    %413 = vmatprep.subr.bf16.mxu0 0
    %414 = vmatpush1.bf16.msra.mxu0 %v406
    %415 = vmatprep.subr.bf16.mxu0 0
    %416 = vmatpush1.bf16.msra.mxu0 %v407
    %417 = vmatprep.subr.bf16.mxu0 0
    %418 = vmatpush1.bf16.msra.mxu0 0
    %419 = vmatprep.subr.bf16.mxu0 0
    %420 = vmatpush1.bf16.msra.mxu0 0
    %421 = vmatprep.subr.bf16.mxu0 0
    %422 = vmatpush1.bf16.msra.mxu0 0
    %423 = vmatprep.subr.bf16.mxu0 0
    %424 = vmatpush1.bf16.msra.mxu0 0
    %425 = vmatprep.subr.bf16.mxu0 0
    %426 = vmatpush1.bf16.msra.mxu0 0
    %427 = vmatprep.subr.bf16.mxu0 0
    %428 = vmatpush1.bf16.msra.mxu0 0
    %429 = vmatprep.subr.bf16.mxu0 0
    %430 = vmatpush1.bf16.msra.mxu0 0
    %431 = vmatprep.subr.bf16.mxu0 0
    %432 = vmatpush1.bf16.msra.mxu0 0
    %433 = vmatprep.subr.bf16.mxu0 0
    %434 = vmatpush1.bf16.msra.mxu0 0
    %435 = vmatprep.subr.bf16.mxu0 0
    %436 = vmatpush1.bf16.msra.mxu0 0
    %437 = vmatprep.subr.bf16.mxu0 0
    %438 = vmatpush1.bf16.msra.mxu0 0
    %439 = vmatprep.subr.bf16.mxu0 0
    %440 = vmatpush1.bf16.msra.mxu0 0
    %441 = vmatprep.subr.bf16.mxu0 0
    %442 = vmatpush1.bf16.msra.mxu0 0
    %443 = vmatprep.subr.bf16.mxu0 0
    %444 = vmatpush1.bf16.msra.mxu0 0
    %445 = vmatprep.mubr.bf16.mxu0 0
    %446 = vmatmul.mubr.bf16.gmra.mrb[0].mxu0 %v411
    %v447 = vpop.f32.mrb[0].mxu0
    %v448 = vadd.f32 %v396, %v447
    %v449 = vpop.f32.mrb[0].mxu0
    %v450 = vpop.f32.mrb[0].mxu0
    %v451 = vpop.f32.mrb[0].mxu0
    %452 = vdwg.mxu0
    %v453 = vsub.f32 %v61, %v448
    %v454 = vadd.f32 %v65, %v448
    %v455 = vld [vmem:[#allocation2 + $0x1c] sm:$0xff]
    %v456 = vpack.c.bf16 %v453, %v453
    %v458 = vunpack.c.l.b16 %v455
    %v459 = vunpack.c.h.b16 %v455
    %v460 = vpack.c.b16 %v458, %v458
    %v461 = vpack.c.b16 %v459, %v459
    %v463 = vsel %vm35, %v456, 0
    %v466 = vsel %vm77, %v460, 0
    %v469 = vsel %vm77, %v461, 0
    %471 = vmatprep.subr.bf16.mxu0 %v469
    %472 = vmatpush1.bf16.msra.mxu0 %v466
    %473 = vmatprep.subr.bf16.mxu0 0
    %474 = vmatpush1.bf16.msra.mxu0 0
    %475 = vmatprep.subr.bf16.mxu0 0
    %476 = vmatpush1.bf16.msra.mxu0 0
    %477 = vmatprep.subr.bf16.mxu0 0
    %478 = vmatpush1.bf16.msra.mxu0 0
    %479 = vmatprep.subr.bf16.mxu0 0
    %480 = vmatpush1.bf16.msra.mxu0 0
    %481 = vmatprep.subr.bf16.mxu0 0
    %482 = vmatpush1.bf16.msra.mxu0 0
    %483 = vmatprep.subr.bf16.mxu0 0
    %484 = vmatpush1.bf16.msra.mxu0 0
    %485 = vmatprep.subr.bf16.mxu0 0
    %486 = vmatpush1.bf16.msra.mxu0 0
    %487 = vmatprep.subr.bf16.mxu0 0
    %488 = vmatpush1.bf16.msra.mxu0 0
    %489 = vmatprep.subr.bf16.mxu0 0
    %490 = vmatpush1.bf16.msra.mxu0 0
    %491 = vmatprep.subr.bf16.mxu0 0
    %492 = vmatpush1.bf16.msra.mxu0 0
    %493 = vmatprep.subr.bf16.mxu0 0
    %494 = vmatpush1.bf16.msra.mxu0 0
    %495 = vmatprep.subr.bf16.mxu0 0
    %496 = vmatpush1.bf16.msra.mxu0 0
    %497 = vmatprep.subr.bf16.mxu0 0
    %498 = vmatpush1.bf16.msra.mxu0 0
    %499 = vmatprep.subr.bf16.mxu0 0
    %500 = vmatpush1.bf16.msra.mxu0 0
    %501 = vmatprep.subr.bf16.mxu0 0
    %502 = vmatpush1.bf16.msra.mxu0 0
    %503 = vmatprep.mubr.bf16.mxu0 0
    %504 = vmatmul.mubr.bf16.gmra.mrb[0].mxu0 %v463
    %v505 = vpop.f32.mrb[0].mxu0
    %v506 = vadd.f32 0.0, %v505
    %v507 = vpop.f32.mrb[0].mxu0
    %v508 = vadd.f32 0.0, %v507
    %v509 = vpop.f32.mrb[0].mxu0
    %v510 = vpop.f32.mrb[0].mxu0
    %511 = vdwg.mxu0
    %v512 = vmax.f32 %v506, %v508
    %v513 = vld [vmem:[#allocation2 + $0x24] sm:$0xf]
    %v514 = vld [vmem:[%s3 + $0x5] sm:$0x1]
    %v515 = vpack.c.bf16 %v512, %v512
    %v517 = vlaneseq
    %v518 = vshrl.u32 %v517, 7
    %v519 = vsub.s32 0, %v518
    %v520 = vrot.slane %v514, %v519
    %v523 = vsel %vm35, %v515, 0
    %v526 = vsel %vm77, %v513, 0
    %528 = vmatprep.subr.bf16.mxu0 0
    %529 = vmatpush1.bf16.msra.mxu0 %v526
    %530 = vmatprep.subr.bf16.mxu0 0
    %531 = vmatpush1.bf16.msra.mxu0 0
    %532 = vmatprep.subr.bf16.mxu0 0
    %533 = vmatpush1.bf16.msra.mxu0 0
    %534 = vmatprep.subr.bf16.mxu0 0
    %535 = vmatpush1.bf16.msra.mxu0 0
    %536 = vmatprep.subr.bf16.mxu0 0
    %537 = vmatpush1.bf16.msra.mxu0 0
    %538 = vmatprep.subr.bf16.mxu0 0
    %539 = vmatpush1.bf16.msra.mxu0 0
    %540 = vmatprep.subr.bf16.mxu0 0
    %541 = vmatpush1.bf16.msra.mxu0 0
    %542 = vmatprep.subr.bf16.mxu0 0
    %543 = vmatpush1.bf16.msra.mxu0 0
    %544 = vmatprep.subr.bf16.mxu0 0
    %545 = vmatpush1.bf16.msra.mxu0 0
    %546 = vmatprep.subr.bf16.mxu0 0
    %547 = vmatpush1.bf16.msra.mxu0 0
    %548 = vmatprep.subr.bf16.mxu0 0
    %549 = vmatpush1.bf16.msra.mxu0 0
    %550 = vmatprep.subr.bf16.mxu0 0
    %551 = vmatpush1.bf16.msra.mxu0 0
    %552 = vmatprep.subr.bf16.mxu0 0
    %553 = vmatpush1.bf16.msra.mxu0 0
    %554 = vmatprep.subr.bf16.mxu0 0
    %555 = vmatpush1.bf16.msra.mxu0 0
    %556 = vmatprep.subr.bf16.mxu0 0
    %557 = vmatpush1.bf16.msra.mxu0 0
    %558 = vmatprep.subr.bf16.mxu0 0
    %559 = vmatpush1.bf16.msra.mxu0 0
    %560 = vmatprep.mubr.bf16.mxu0 0
    %561 = vmatmul.mubr.bf16.gmra.mrb[0].mxu0 %v523
    %v562 = vpop.f32.mrb[0].mxu0
    %v563 = vadd.f32 %v520, %v562
    %v564 = vpop.f32.mrb[0].mxu0
    %v565 = vpop.f32.mrb[0].mxu0
    %v566 = vpop.f32.mrb[0].mxu0
    %567 = vdwg.mxu0
    %v568 = vld [vmem:[#allocation2 + $0x28] sm:$0xf]
    %v569 = vld [vmem:[#allocation2 + $0x74] sm:$0xf]
    %v570 = vld [vmem:[#allocation2 + $0xc0] sm:$0xf]
    %v571 = vld [vmem:[#allocation2 + $0x10c] sm:$0xf]
    %v572 = vld [vmem:[%s3 + $0x6] sm:$0x1]
    %v573 = vpack.c.bf16 %v563, %v563
    %v575 = vlaneseq
    %v576 = vshrl.u32 %v575, 7
    %v577 = vsub.s32 0, %v576
    %v578 = vrot.slane %v572, %v577
    %v584 = vunpack.c.l.b16 %v568
    %v585 = vunpack.c.l.b16 %v569
    %v586 = vunpack.c.l.b16 %v570
    %v587 = vunpack.c.l.b16 %v571
    %v588 = vpack.c.b16 %v585, %v584
    %v589 = vpack.c.b16 %v587, %v586
    %v593 = vsel %vm205, %v573, 0
    %595 = vmatprep.subr.bf16.mxu0 0
    %596 = vmatpush1.bf16.msra.mxu0 %v588
    %597 = vmatprep.subr.bf16.mxu0 0
    %598 = vmatpush1.bf16.msra.mxu0 %v589
    %599 = vmatprep.subr.bf16.mxu0 0
    %600 = vmatpush1.bf16.msra.mxu0 0
    %601 = vmatprep.subr.bf16.mxu0 0
    %602 = vmatpush1.bf16.msra.mxu0 0
    %603 = vmatprep.subr.bf16.mxu0 0
    %604 = vmatpush1.bf16.msra.mxu0 0
    %605 = vmatprep.subr.bf16.mxu0 0
    %606 = vmatpush1.bf16.msra.mxu0 0
    %607 = vmatprep.subr.bf16.mxu0 0
    %608 = vmatpush1.bf16.msra.mxu0 0
    %609 = vmatprep.subr.bf16.mxu0 0
    %610 = vmatpush1.bf16.msra.mxu0 0
    %611 = vmatprep.subr.bf16.mxu0 0
    %612 = vmatpush1.bf16.msra.mxu0 0
    %613 = vmatprep.subr.bf16.mxu0 0
    %614 = vmatpush1.bf16.msra.mxu0 0
    %615 = vmatprep.subr.bf16.mxu0 0
    %616 = vmatpush1.bf16.msra.mxu0 0
    %617 = vmatprep.subr.bf16.mxu0 0
    %618 = vmatpush1.bf16.msra.mxu0 0
    %619 = vmatprep.subr.bf16.mxu0 0
    %620 = vmatpush1.bf16.msra.mxu0 0
    %621 = vmatprep.subr.bf16.mxu0 0
    %622 = vmatpush1.bf16.msra.mxu0 0
    %623 = vmatprep.subr.bf16.mxu0 0
    %624 = vmatpush1.bf16.msra.mxu0 0
    %625 = vmatprep.subr.bf16.mxu0 0
    %626 = vmatpush1.bf16.msra.mxu0 0
    %627 = vmatprep.mubr.bf16.mxu0 0
    %628 = vmatmul.mubr.bf16.gmra.mrb[0].mxu0 %v593
    %v629 = vpop.f32.mrb[0].mxu0
    %v630 = vadd.f32 %v578, %v629
    %v631 = vpop.f32.mrb[0].mxu0
    %v632 = vpop.f32.mrb[0].mxu0
    %v633 = vpop.f32.mrb[0].mxu0
    %634 = vdwg.mxu0
    %v635 = vmax.f32 %v630, 0.0
    %v636 = vld [vmem:[#allocation2 + $0x2c] sm:$0xf]
    %v637 = vld [vmem:[#allocation2 + $0x78] sm:$0xf]
    %v638 = vld [vmem:[#allocation2 + $0xc4] sm:$0xf]
    %v639 = vld [vmem:[#allocation2 + $0x110] sm:$0xf]
    %v640 = vld [vmem:[%s3 + $0x7] sm:$0x1]
    %v641 = vpack.c.bf16 %v635, %v635
    %v643 = vlaneseq
    %v644 = vshrl.u32 %v643, 7
    %v645 = vsub.s32 0, %v644
    %v646 = vrot.slane %v640, %v645
    %v652 = vunpack.c.l.b16 %v636
    %v653 = vunpack.c.l.b16 %v637
    %v654 = vunpack.c.l.b16 %v638
    %v655 = vunpack.c.l.b16 %v639
    %v656 = vpack.c.b16 %v653, %v652
    %v657 = vpack.c.b16 %v655, %v654
    %v661 = vsel %vm205, %v641, 0
    %663 = vmatprep.subr.bf16.mxu0 0
    %664 = vmatpush1.bf16.msra.mxu0 %v656
    %665 = vmatprep.subr.bf16.mxu0 0
    %666 = vmatpush1.bf16.msra.mxu0 %v657
    %667 = vmatprep.subr.bf16.mxu0 0
    %668 = vmatpush1.bf16.msra.mxu0 0
    %669 = vmatprep.subr.bf16.mxu0 0
    %670 = vmatpush1.bf16.msra.mxu0 0
    %671 = vmatprep.subr.bf16.mxu0 0
    %672 = vmatpush1.bf16.msra.mxu0 0
    %673 = vmatprep.subr.bf16.mxu0 0
    %674 = vmatpush1.bf16.msra.mxu0 0
    %675 = vmatprep.subr.bf16.mxu0 0
    %676 = vmatpush1.bf16.msra.mxu0 0
    %677 = vmatprep.subr.bf16.mxu0 0
    %678 = vmatpush1.bf16.msra.mxu0 0
    %679 = vmatprep.subr.bf16.mxu0 0
    %680 = vmatpush1.bf16.msra.mxu0 0
    %681 = vmatprep.subr.bf16.mxu0 0
    %682 = vmatpush1.bf16.msra.mxu0 0
    %683 = vmatprep.subr.bf16.mxu0 0
    %684 = vmatpush1.bf16.msra.mxu0 0
    %685 = vmatprep.subr.bf16.mxu0 0
    %686 = vmatpush1.bf16.msra.mxu0 0
    %687 = vmatprep.subr.bf16.mxu0 0
    %688 = vmatpush1.bf16.msra.mxu0 0
    %689 = vmatprep.subr.bf16.mxu0 0
    %690 = vmatpush1.bf16.msra.mxu0 0
    %691 = vmatprep.subr.bf16.mxu0 0
    %692 = vmatpush1.bf16.msra.mxu0 0
    %693 = vmatprep.subr.bf16.mxu0 0
    %694 = vmatpush1.bf16.msra.mxu0 0
    %695 = vmatprep.mubr.bf16.mxu0 0
    %696 = vmatmul.mubr.bf16.gmra.mrb[0].mxu0 %v661
    %v697 = vpop.f32.mrb[0].mxu0
    %v698 = vadd.f32 %v646, %v697
    %v699 = vpop.f32.mrb[0].mxu0
    %v700 = vpop.f32.mrb[0].mxu0
    %v701 = vpop.f32.mrb[0].mxu0
    %702 = vdwg.mxu0
    %v703 = vmax.f32 %v698, 0.0
    %v704 = vld [vmem:[#allocation2 + $0x30] sm:$0xf]
    %v705 = vld [vmem:[#allocation2 + $0x7c] sm:$0xf]
    %v706 = vld [vmem:[#allocation2 + $0xc8] sm:$0xf]
    %v707 = vld [vmem:[#allocation2 + $0x114] sm:$0xf]
    %v708 = vld [vmem:[%s3 + $0x8] sm:$0x1]
    %v709 = vpack.c.bf16 %v703, %v703
    %v711 = vlaneseq
    %v712 = vshrl.u32 %v711, 7
    %v713 = vsub.s32 0, %v712
    %v714 = vrot.slane %v708, %v713
    %v720 = vunpack.c.l.b16 %v704
    %v721 = vunpack.c.l.b16 %v705
    %v722 = vunpack.c.l.b16 %v706
    %v723 = vunpack.c.l.b16 %v707
    %v724 = vpack.c.b16 %v721, %v720
    %v725 = vpack.c.b16 %v723, %v722
    %v729 = vsel %vm205, %v709, 0
    %731 = vmatprep.subr.bf16.mxu0 0
    %732 = vmatpush1.bf16.msra.mxu0 %v724
    %733 = vmatprep.subr.bf16.mxu0 0
    %734 = vmatpush1.bf16.msra.mxu0 %v725
    %735 = vmatprep.subr.bf16.mxu0 0
    %736 = vmatpush1.bf16.msra.mxu0 0
    %737 = vmatprep.subr.bf16.mxu0 0
    %738 = vmatpush1.bf16.msra.mxu0 0
    %739 = vmatprep.subr.bf16.mxu0 0
    %740 = vmatpush1.bf16.msra.mxu0 0
    %741 = vmatprep.subr.bf16.mxu0 0
    %742 = vmatpush1.bf16.msra.mxu0 0
    %743 = vmatprep.subr.bf16.mxu0 0
    %744 = vmatpush1.bf16.msra.mxu0 0
    %745 = vmatprep.subr.bf16.mxu0 0
    %746 = vmatpush1.bf16.msra.mxu0 0
    %747 = vmatprep.subr.bf16.mxu0 0
    %748 = vmatpush1.bf16.msra.mxu0 0
    %749 = vmatprep.subr.bf16.mxu0 0
    %750 = vmatpush1.bf16.msra.mxu0 0
    %751 = vmatprep.subr.bf16.mxu0 0
    %752 = vmatpush1.bf16.msra.mxu0 0
    %753 = vmatprep.subr.bf16.mxu0 0
    %754 = vmatpush1.bf16.msra.mxu0 0
    %755 = vmatprep.subr.bf16.mxu0 0
    %756 = vmatpush1.bf16.msra.mxu0 0
    %757 = vmatprep.subr.bf16.mxu0 0
    %758 = vmatpush1.bf16.msra.mxu0 0
    %759 = vmatprep.subr.bf16.mxu0 0
    %760 = vmatpush1.bf16.msra.mxu0 0
    %761 = vmatprep.subr.bf16.mxu0 0
    %762 = vmatpush1.bf16.msra.mxu0 0
    %763 = vmatprep.mubr.bf16.mxu0 0
    %764 = vmatmul.mubr.bf16.gmra.mrb[0].mxu0 %v729
    %v765 = vpop.f32.mrb[0].mxu0
    %v766 = vadd.f32 %v714, %v765
    %v767 = vpop.f32.mrb[0].mxu0
    %v768 = vpop.f32.mrb[0].mxu0
    %v769 = vpop.f32.mrb[0].mxu0
    %770 = vdwg.mxu0
    %v771 = vmax.f32 %v766, 0.0
    %v772 = vld [vmem:[#allocation2 + $0x34] sm:$0xf]
    %v773 = vld [vmem:[#allocation2 + $0x80] sm:$0xf]
    %v774 = vld [vmem:[#allocation2 + $0xcc] sm:$0xf]
    %v775 = vld [vmem:[#allocation2 + $0x118] sm:$0xf]
    %v776 = vld [vmem:[%s3 + $0x9] sm:$0x1]
    %v777 = vpack.c.bf16 %v771, %v771
    %v779 = vlaneseq
    %v780 = vshrl.u32 %v779, 7
    %v781 = vsub.s32 0, %v780
    %v782 = vrot.slane %v776, %v781
    %v788 = vunpack.c.l.b16 %v772
    %v789 = vunpack.c.l.b16 %v773
    %v790 = vunpack.c.l.b16 %v774
    %v791 = vunpack.c.l.b16 %v775
    %v792 = vpack.c.b16 %v789, %v788
    %v793 = vpack.c.b16 %v791, %v790
    %v797 = vsel %vm205, %v777, 0
    %799 = vmatprep.subr.bf16.mxu0 0
    %800 = vmatpush1.bf16.msra.mxu0 %v792
    %801 = vmatprep.subr.bf16.mxu0 0
    %802 = vmatpush1.bf16.msra.mxu0 %v793
    %803 = vmatprep.subr.bf16.mxu0 0
    %804 = vmatpush1.bf16.msra.mxu0 0
    %805 = vmatprep.subr.bf16.mxu0 0
    %806 = vmatpush1.bf16.msra.mxu0 0
    %807 = vmatprep.subr.bf16.mxu0 0
    %808 = vmatpush1.bf16.msra.mxu0 0
    %809 = vmatprep.subr.bf16.mxu0 0
    %810 = vmatpush1.bf16.msra.mxu0 0
    %811 = vmatprep.subr.bf16.mxu0 0
    %812 = vmatpush1.bf16.msra.mxu0 0
    %813 = vmatprep.subr.bf16.mxu0 0
    %814 = vmatpush1.bf16.msra.mxu0 0
    %815 = vmatprep.subr.bf16.mxu0 0
    %816 = vmatpush1.bf16.msra.mxu0 0
    %817 = vmatprep.subr.bf16.mxu0 0
    %818 = vmatpush1.bf16.msra.mxu0 0
    %819 = vmatprep.subr.bf16.mxu0 0
    %820 = vmatpush1.bf16.msra.mxu0 0
    %821 = vmatprep.subr.bf16.mxu0 0
    %822 = vmatpush1.bf16.msra.mxu0 0
    %823 = vmatprep.subr.bf16.mxu0 0
    %824 = vmatpush1.bf16.msra.mxu0 0
    %825 = vmatprep.subr.bf16.mxu0 0
    %826 = vmatpush1.bf16.msra.mxu0 0
    %827 = vmatprep.subr.bf16.mxu0 0
    %828 = vmatpush1.bf16.msra.mxu0 0
    %829 = vmatprep.subr.bf16.mxu0 0
    %830 = vmatpush1.bf16.msra.mxu0 0
    %831 = vmatprep.mubr.bf16.mxu0 0
    %832 = vmatmul.mubr.bf16.gmra.mrb[0].mxu0 %v797
    %v833 = vpop.f32.mrb[0].mxu0
    %v834 = vadd.f32 %v782, %v833
    %v835 = vpop.f32.mrb[0].mxu0
    %v836 = vpop.f32.mrb[0].mxu0
    %v837 = vpop.f32.mrb[0].mxu0
    %838 = vdwg.mxu0
    %v839 = vsub.f32 %v453, %v834
    %v840 = vadd.f32 %v454, %v834
    %v841 = vld [vmem:[#allocation2 + $0x38] sm:$0xf]
    %v842 = vld [vmem:[%s3 + $0xa] sm:$0x1]
    %v843 = vpack.c.bf16 %v839, %v839
    %v845 = vlaneseq
    %v846 = vshrl.u32 %v845, 7
    %v847 = vsub.s32 0, %v846
    %v848 = vrot.slane %v842, %v847
    %v851 = vsel %vm35, %v843, 0
    %v854 = vsel %vm77, %v841, 0
    %856 = vmatprep.subr.bf16.mxu0 0
    %857 = vmatpush1.bf16.msra.mxu0 %v854
    %858 = vmatprep.subr.bf16.mxu0 0
    %859 = vmatpush1.bf16.msra.mxu0 0
    %860 = vmatprep.subr.bf16.mxu0 0
    %861 = vmatpush1.bf16.msra.mxu0 0
    %862 = vmatprep.subr.bf16.mxu0 0
    %863 = vmatpush1.bf16.msra.mxu0 0
    %864 = vmatprep.subr.bf16.mxu0 0
    %865 = vmatpush1.bf16.msra.mxu0 0
    %866 = vmatprep.subr.bf16.mxu0 0
    %867 = vmatpush1.bf16.msra.mxu0 0
    %868 = vmatprep.subr.bf16.mxu0 0
    %869 = vmatpush1.bf16.msra.mxu0 0
    %870 = vmatprep.subr.bf16.mxu0 0
    %871 = vmatpush1.bf16.msra.mxu0 0
    %872 = vmatprep.subr.bf16.mxu0 0
    %873 = vmatpush1.bf16.msra.mxu0 0
    %874 = vmatprep.subr.bf16.mxu0 0
    %875 = vmatpush1.bf16.msra.mxu0 0
    %876 = vmatprep.subr.bf16.mxu0 0
    %877 = vmatpush1.bf16.msra.mxu0 0
    %878 = vmatprep.subr.bf16.mxu0 0
    %879 = vmatpush1.bf16.msra.mxu0 0
    %880 = vmatprep.subr.bf16.mxu0 0
    %881 = vmatpush1.bf16.msra.mxu0 0
    %882 = vmatprep.subr.bf16.mxu0 0
    %883 = vmatpush1.bf16.msra.mxu0 0
    %884 = vmatprep.subr.bf16.mxu0 0
    %885 = vmatpush1.bf16.msra.mxu0 0
    %886 = vmatprep.subr.bf16.mxu0 0
    %887 = vmatpush1.bf16.msra.mxu0 0
    %888 = vmatprep.mubr.bf16.mxu0 0
    %889 = vmatmul.mubr.bf16.gmra.mrb[0].mxu0 %v851
    %v890 = vpop.f32.mrb[0].mxu0
    %v891 = vadd.f32 %v848, %v890
    %v892 = vpop.f32.mrb[0].mxu0
    %v893 = vpop.f32.mrb[0].mxu0
    %v894 = vpop.f32.mrb[0].mxu0
    %895 = vdwg.mxu0
    %v896 = vld [vmem:[#allocation2 + $0x3c] sm:$0xf]
    %v897 = vld [vmem:[#allocation2 + $0x88] sm:$0xf]
    %v898 = vld [vmem:[#allocation2 + $0xd4] sm:$0xf]
    %v899 = vld [vmem:[#allocation2 + $0x120] sm:$0xf]
    %v900 = vld [vmem:[%s3 + $0xb] sm:$0x1]
    %v901 = vpack.c.bf16 %v891, %v891
    %v903 = vlaneseq
    %v904 = vshrl.u32 %v903, 7
    %v905 = vsub.s32 0, %v904
    %v906 = vrot.slane %v900, %v905
    %v912 = vunpack.c.l.b16 %v896
    %v913 = vunpack.c.l.b16 %v897
    %v914 = vunpack.c.l.b16 %v898
    %v915 = vunpack.c.l.b16 %v899
    %v916 = vpack.c.b16 %v913, %v912
    %v917 = vpack.c.b16 %v915, %v914
    %v921 = vsel %vm205, %v901, 0
    %923 = vmatprep.subr.bf16.mxu0 0
    %924 = vmatpush1.bf16.msra.mxu0 %v916
    %925 = vmatprep.subr.bf16.mxu0 0
    %926 = vmatpush1.bf16.msra.mxu0 %v917
    %927 = vmatprep.subr.bf16.mxu0 0
    %928 = vmatpush1.bf16.msra.mxu0 0
    %929 = vmatprep.subr.bf16.mxu0 0
    %930 = vmatpush1.bf16.msra.mxu0 0
    %931 = vmatprep.subr.bf16.mxu0 0
    %932 = vmatpush1.bf16.msra.mxu0 0
    %933 = vmatprep.subr.bf16.mxu0 0
    %934 = vmatpush1.bf16.msra.mxu0 0
    %935 = vmatprep.subr.bf16.mxu0 0
    %936 = vmatpush1.bf16.msra.mxu0 0
    %937 = vmatprep.subr.bf16.mxu0 0
    %938 = vmatpush1.bf16.msra.mxu0 0
    %939 = vmatprep.subr.bf16.mxu0 0
    %940 = vmatpush1.bf16.msra.mxu0 0
    %941 = vmatprep.subr.bf16.mxu0 0
    %942 = vmatpush1.bf16.msra.mxu0 0
    %943 = vmatprep.subr.bf16.mxu0 0
    %944 = vmatpush1.bf16.msra.mxu0 0
    %945 = vmatprep.subr.bf16.mxu0 0
    %946 = vmatpush1.bf16.msra.mxu0 0
    %947 = vmatprep.subr.bf16.mxu0 0
    %948 = vmatpush1.bf16.msra.mxu0 0
    %949 = vmatprep.subr.bf16.mxu0 0
    %950 = vmatpush1.bf16.msra.mxu0 0
    %951 = vmatprep.subr.bf16.mxu0 0
    %952 = vmatpush1.bf16.msra.mxu0 0
    %953 = vmatprep.subr.bf16.mxu0 0
    %954 = vmatpush1.bf16.msra.mxu0 0
    %955 = vmatprep.mubr.bf16.mxu0 0
    %956 = vmatmul.mubr.bf16.gmra.mrb[0].mxu0 %v921
    %v957 = vpop.f32.mrb[0].mxu0
    %v958 = vadd.f32 %v906, %v957
    %v959 = vpop.f32.mrb[0].mxu0
    %v960 = vpop.f32.mrb[0].mxu0
    %v961 = vpop.f32.mrb[0].mxu0
    %962 = vdwg.mxu0
    %v963 = vmax.f32 %v958, 0.0
    %v964 = vld [vmem:[#allocation2 + $0x40] sm:$0xf]
    %v965 = vld [vmem:[#allocation2 + $0x8c] sm:$0xf]
    %v966 = vld [vmem:[#allocation2 + $0xd8] sm:$0xf]
    %v967 = vld [vmem:[#allocation2 + $0x124] sm:$0xf]
    %v968 = vld [vmem:[%s3 + $0xc] sm:$0x1]
    %v969 = vpack.c.bf16 %v963, %v963
    %v971 = vlaneseq
    %v972 = vshrl.u32 %v971, 7
    %v973 = vsub.s32 0, %v972
    %v974 = vrot.slane %v968, %v973
    %v980 = vunpack.c.l.b16 %v964
    %v981 = vunpack.c.l.b16 %v965
    %v982 = vunpack.c.l.b16 %v966
    %v983 = vunpack.c.l.b16 %v967
    %v984 = vpack.c.b16 %v981, %v980
    %v985 = vpack.c.b16 %v983, %v982
    %v989 = vsel %vm205, %v969, 0
    %991 = vmatprep.subr.bf16.mxu0 0
    %992 = vmatpush1.bf16.msra.mxu0 %v984
    %993 = vmatprep.subr.bf16.mxu0 0
    %994 = vmatpush1.bf16.msra.mxu0 %v985
    %995 = vmatprep.subr.bf16.mxu0 0
    %996 = vmatpush1.bf16.msra.mxu0 0
    %997 = vmatprep.subr.bf16.mxu0 0
    %998 = vmatpush1.bf16.msra.mxu0 0
    %999 = vmatprep.subr.bf16.mxu0 0
    %1000 = vmatpush1.bf16.msra.mxu0 0
    %1001 = vmatprep.subr.bf16.mxu0 0
    %1002 = vmatpush1.bf16.msra.mxu0 0
    %1003 = vmatprep.subr.bf16.mxu0 0
    %1004 = vmatpush1.bf16.msra.mxu0 0
    %1005 = vmatprep.subr.bf16.mxu0 0
    %1006 = vmatpush1.bf16.msra.mxu0 0
    %1007 = vmatprep.subr.bf16.mxu0 0
    %1008 = vmatpush1.bf16.msra.mxu0 0
    %1009 = vmatprep.subr.bf16.mxu0 0
    %1010 = vmatpush1.bf16.msra.mxu0 0
    %1011 = vmatprep.subr.bf16.mxu0 0
    %1012 = vmatpush1.bf16.msra.mxu0 0
    %1013 = vmatprep.subr.bf16.mxu0 0
    %1014 = vmatpush1.bf16.msra.mxu0 0
    %1015 = vmatprep.subr.bf16.mxu0 0
    %1016 = vmatpush1.bf16.msra.mxu0 0
    %1017 = vmatprep.subr.bf16.mxu0 0
    %1018 = vmatpush1.bf16.msra.mxu0 0
    %1019 = vmatprep.subr.bf16.mxu0 0
    %1020 = vmatpush1.bf16.msra.mxu0 0
    %1021 = vmatprep.subr.bf16.mxu0 0
    %1022 = vmatpush1.bf16.msra.mxu0 0
    %1023 = vmatprep.mubr.bf16.mxu0 0
    %1024 = vmatmul.mubr.bf16.gmra.mrb[0].mxu0 %v989
    %v1025 = vpop.f32.mrb[0].mxu0
    %v1026 = vadd.f32 %v974, %v1025
    %v1027 = vpop.f32.mrb[0].mxu0
    %v1028 = vpop.f32.mrb[0].mxu0
    %v1029 = vpop.f32.mrb[0].mxu0
    %1030 = vdwg.mxu0
    %v1031 = vmax.f32 %v1026, 0.0
    %v1032 = vld [vmem:[#allocation2 + $0x44] sm:$0xf]
    %v1033 = vld [vmem:[#allocation2 + $0x90] sm:$0xf]
    %v1034 = vld [vmem:[#allocation2 + $0xdc] sm:$0xf]
    %v1035 = vld [vmem:[#allocation2 + $0x128] sm:$0xf]
    %v1036 = vld [vmem:[%s3 + $0xd] sm:$0x1]
    %v1037 = vpack.c.bf16 %v1031, %v1031
    %v1039 = vlaneseq
    %v1040 = vshrl.u32 %v1039, 7
    %v1041 = vsub.s32 0, %v1040
    %v1042 = vrot.slane %v1036, %v1041
    %v1048 = vunpack.c.l.b16 %v1032
    %v1049 = vunpack.c.l.b16 %v1033
    %v1050 = vunpack.c.l.b16 %v1034
    %v1051 = vunpack.c.l.b16 %v1035
    %v1052 = vpack.c.b16 %v1049, %v1048
    %v1053 = vpack.c.b16 %v1051, %v1050
    %v1057 = vsel %vm205, %v1037, 0
    %1059 = vmatprep.subr.bf16.mxu0 0
    %1060 = vmatpush1.bf16.msra.mxu0 %v1052
    %1061 = vmatprep.subr.bf16.mxu0 0
    %1062 = vmatpush1.bf16.msra.mxu0 %v1053
    %1063 = vmatprep.subr.bf16.mxu0 0
    %1064 = vmatpush1.bf16.msra.mxu0 0
    %1065 = vmatprep.subr.bf16.mxu0 0
    %1066 = vmatpush1.bf16.msra.mxu0 0
    %1067 = vmatprep.subr.bf16.mxu0 0
    %1068 = vmatpush1.bf16.msra.mxu0 0
    %1069 = vmatprep.subr.bf16.mxu0 0
    %1070 = vmatpush1.bf16.msra.mxu0 0
    %1071 = vmatprep.subr.bf16.mxu0 0
    %1072 = vmatpush1.bf16.msra.mxu0 0
    %1073 = vmatprep.subr.bf16.mxu0 0
    %1074 = vmatpush1.bf16.msra.mxu0 0
    %1075 = vmatprep.subr.bf16.mxu0 0
    %1076 = vmatpush1.bf16.msra.mxu0 0
    %1077 = vmatprep.subr.bf16.mxu0 0
    %1078 = vmatpush1.bf16.msra.mxu0 0
    %1079 = vmatprep.subr.bf16.mxu0 0
    %1080 = vmatpush1.bf16.msra.mxu0 0
    %1081 = vmatprep.subr.bf16.mxu0 0
    %1082 = vmatpush1.bf16.msra.mxu0 0
    %1083 = vmatprep.subr.bf16.mxu0 0
    %1084 = vmatpush1.bf16.msra.mxu0 0
    %1085 = vmatprep.subr.bf16.mxu0 0
    %1086 = vmatpush1.bf16.msra.mxu0 0
    %1087 = vmatprep.subr.bf16.mxu0 0
    %1088 = vmatpush1.bf16.msra.mxu0 0
    %1089 = vmatprep.subr.bf16.mxu0 0
    %1090 = vmatpush1.bf16.msra.mxu0 0
    %1091 = vmatprep.mubr.bf16.mxu0 0
    %1092 = vmatmul.mubr.bf16.gmra.mrb[0].mxu0 %v1057
    %v1093 = vpop.f32.mrb[0].mxu0
    %v1094 = vadd.f32 %v1042, %v1093
    %v1095 = vpop.f32.mrb[0].mxu0
    %v1096 = vpop.f32.mrb[0].mxu0
    %v1097 = vpop.f32.mrb[0].mxu0
    %1098 = vdwg.mxu0
    %v1099 = vmax.f32 %v1094, 0.0
    %v1100 = vld [vmem:[#allocation2 + $0x48] sm:$0xf]
    %v1101 = vld [vmem:[#allocation2 + $0x94] sm:$0xf]
    %v1102 = vld [vmem:[#allocation2 + $0xe0] sm:$0xf]
    %v1103 = vld [vmem:[#allocation2 + $0x12c] sm:$0xf]
    %v1104 = vld [vmem:[%s3 + $0xe] sm:$0x1]
    %v1105 = vpack.c.bf16 %v1099, %v1099
    %v1107 = vlaneseq
    %v1108 = vshrl.u32 %v1107, 7
    %v1109 = vsub.s32 0, %v1108
    %v1110 = vrot.slane %v1104, %v1109
    %v1116 = vunpack.c.l.b16 %v1100
    %v1117 = vunpack.c.l.b16 %v1101
    %v1118 = vunpack.c.l.b16 %v1102
    %v1119 = vunpack.c.l.b16 %v1103
    %v1120 = vpack.c.b16 %v1117, %v1116
    %v1121 = vpack.c.b16 %v1119, %v1118
    %v1125 = vsel %vm205, %v1105, 0
    %1127 = vmatprep.subr.bf16.mxu0 0
    %1128 = vmatpush1.bf16.msra.mxu0 %v1120
    %1129 = vmatprep.subr.bf16.mxu0 0
    %1130 = vmatpush1.bf16.msra.mxu0 %v1121
    %1131 = vmatprep.subr.bf16.mxu0 0
    %1132 = vmatpush1.bf16.msra.mxu0 0
    %1133 = vmatprep.subr.bf16.mxu0 0
    %1134 = vmatpush1.bf16.msra.mxu0 0
    %1135 = vmatprep.subr.bf16.mxu0 0
    %1136 = vmatpush1.bf16.msra.mxu0 0
    %1137 = vmatprep.subr.bf16.mxu0 0
    %1138 = vmatpush1.bf16.msra.mxu0 0
    %1139 = vmatprep.subr.bf16.mxu0 0
    %1140 = vmatpush1.bf16.msra.mxu0 0
    %1141 = vmatprep.subr.bf16.mxu0 0
    %1142 = vmatpush1.bf16.msra.mxu0 0
    %1143 = vmatprep.subr.bf16.mxu0 0
    %1144 = vmatpush1.bf16.msra.mxu0 0
    %1145 = vmatprep.subr.bf16.mxu0 0
    %1146 = vmatpush1.bf16.msra.mxu0 0
    %1147 = vmatprep.subr.bf16.mxu0 0
    %1148 = vmatpush1.bf16.msra.mxu0 0
    %1149 = vmatprep.subr.bf16.mxu0 0
    %1150 = vmatpush1.bf16.msra.mxu0 0
    %1151 = vmatprep.subr.bf16.mxu0 0
    %1152 = vmatpush1.bf16.msra.mxu0 0
    %1153 = vmatprep.subr.bf16.mxu0 0
    %1154 = vmatpush1.bf16.msra.mxu0 0
    %1155 = vmatprep.subr.bf16.mxu0 0
    %1156 = vmatpush1.bf16.msra.mxu0 0
    %1157 = vmatprep.subr.bf16.mxu0 0
    %1158 = vmatpush1.bf16.msra.mxu0 0
    %1159 = vmatprep.mubr.bf16.mxu0 0
    %1160 = vmatmul.mubr.bf16.gmra.mrb[0].mxu0 %v1125
    %v1161 = vpop.f32.mrb[0].mxu0
    %v1162 = vadd.f32 %v1110, %v1161
    %v1163 = vpop.f32.mrb[0].mxu0
    %v1164 = vpop.f32.mrb[0].mxu0
    %v1165 = vpop.f32.mrb[0].mxu0
    %1166 = vdwg.mxu0
    %v1167 = vadd.f32 %v840, %v1162
    %v1168 = vlaneseq
    %v1169 = vand.u32 %v1168, 127
    %vm1170 = vcmp.lt.s32.totalorder %v1169, 4
    %vm1171 = vcmp.gt.f32.partialorder %v1167, 20.0
    %v1172 = vmin.f32 %v1167, 20.0
    %v1173 = vmul.f32 %v1172, 1.442695
    %v1174 = vpow.pop %v1173
    %v1175 = vadd.f32 %v1174, 1.0
    %v1176 = vlog2.pop %v1175
    %v1177 = vmul.f32 %v1176, 0.6931472
    %v1178 = vmul.f32 -0.5, %v1174
    %v1179 = vadd.f32 %v1178, 1.0
    %v1180 = vmul.f32 %v1179, %v1174
    %v1181 = vand.u32 2147483647, %v1174
    %vm1182 = vcmp.lt.f32.partialorder %v1181, 0.0004427343
    %v1183 = vsel %vm1182, %v1180, %v1177
    %v1184 = vsel %vm1171, %v1167, %v1183
    %v1185 = vsub.f32 %v1167, %v59
    %1187 = vrot.lane.b32.xlu0 %v1185, 120
    %v1188 = vpop.permute.xlu0 %1187
    %1191 = vrot.lane.b32.xlu0 %v1184, 120
    %v1192 = vpop.permute.xlu0 %1191
    %v1194 = vsel %vm1170, %v1188, %v1192
    %1195 = vset.pattern.permute.xlu0 2
    %1196 = vperm.xlu0 %1195, %v34
    %v1197 = vpop.permute.xlu0 %1196
    %v1199 = vmul.f32 %v1194, %v1197
    %v1200 = vmul.f32 %v1199, %v49
    %v1201 = vsel %vm1170, %v40, 0.0
    %v1202 = vadd.f32 %v1200, %v1201
    %1203 = vst.msk [vmem:[#allocation5] sm:$0xff] %vm35, %v1202
    // Predicated region
    $region22: #{tpu_custom_call.1} parent=1 // pred_check
      _
    $region23: #{tpu_custom_call.1} parent=1 // pred_check_branch
      %1205 = sbr.rel (0) target = $region25
    $region24: #{tpu_custom_call.1} parent=1 // pred_region
      %s1207 = ssub.s32 128, 128
      %1208 = vsyncadd [#allocation4], %s1207
      %s1210 = sshll.u32 [#allocation5], 4
      %s1211 = int_to_ptr.vmem [resolvable:$true] %s1210
      %1213 = dma.vmem_to_hbm [thread:$0]  %s1211, 128, %s4, [#allocation4]
    $region25: #{tpu_custom_call.1} parent=1 // pred_fallthru
      _
    // Predicated region
    $region26: #{tpu_custom_call.1} parent=1 // pred_check
      _
    $region27: #{tpu_custom_call.1} parent=1 // pred_check_branch
      %1215 = sbr.rel (0) target = $region29
    $region28: #{tpu_custom_call.1} parent=1 // pred_region
      %1216 = dma.done [#allocation4], 128
    $region29: #{tpu_custom_call.1} parent=1 // pred_fallthru
      _
    %1217 = vsyncpa [#allocation3], 1
    %1218 = vsyncpa [#allocation4], 1

</llo_original>
